<compile_context>
chip_gen: v7x
topology: tpu7x:2x2x1
jax: 0.10.0
libtpu: 0.0.40
codegen_flags: <defaults>
</compile_context>

<pallas_src>
import functools
import math

import jax
import jax.numpy as jnp
from jax.experimental import pallas as pl
from jax.experimental.pallas import tpu as pltpu

D_MODEL = 128
NUM_HEADS = 8


def _mha_kernel(x_ref, wqkv_ref, bqkv_ref, wo_ref, bo_ref, out_ref, *,
                num_heads, d_k, tq, fuse_q):
    """One grid step == (batch element b, query tile qi).

    x_ref:    (1, S, D)   VMEM, compute dtype (bf16 or f32), full sequence
    wqkv_ref: (D, 3*D)    VMEM, compute dtype.  Columns = [Wq*scale | Wk | Wv]
    bqkv_ref: (1, 3*D)    VMEM, f32.            [bq*scale | bk | bv]
    wo_ref:   (D, D)      VMEM, compute dtype
    bo_ref:   (1, D)      VMEM, f32
    out_ref:  (1, TQ, D)  VMEM, f32
    """
    dm = num_heads * d_k
    seq = x_ref.shape[1]
    cdt = x_ref.dtype                                         # MXU operand dtype

    x = x_ref[0]                                              # (S, D)

    if fuse_q:
        # Single fused (S, D) @ (D, 3D) projection -> Q | K | V (MXU N=384).
        qkv = jnp.dot(x, wqkv_ref[...],
                      preferred_element_type=jnp.float32) + bqkv_ref[...]
        q = qkv[:, :dm]                                       # (TQ==S, D), pre-scaled
        k = qkv[:, dm:2 * dm]                                 # (S, D)
        v = qkv[:, 2 * dm:]                                   # (S, D)
    else:
        # Q projection only for this query tile; fused K|V (N=256) over full S.
        # TODO(synk): K/V projection is recomputed per query tile; for very long
        # sequences split projection and attention into two passes instead.
        row0 = pl.multiple_of(pl.program_id(1) * tq, tq)
        xq = x_ref[0, pl.ds(row0, tq), :]                     # (TQ, D)
        q = jnp.dot(xq, wqkv_ref[:, :dm],
                    preferred_element_type=jnp.float32) + bqkv_ref[:, :dm]
        kv = jnp.dot(x, wqkv_ref[:, dm:],
                     preferred_element_type=jnp.float32) + bqkv_ref[:, dm:]
        k = kv[:, :dm]
        v = kv[:, dm:]

    # (rows, D) -> (H, rows, d_k): one reshape + leading-axis swap per tensor
    # (replaces the old 8x 16-lane slices + stack/concatenate relayouts).
    qh = q.reshape(tq, num_heads, d_k).swapaxes(0, 1).astype(cdt)    # (H, TQ, dk)
    kh = k.reshape(seq, num_heads, d_k).swapaxes(0, 1).astype(cdt)   # (H, S,  dk)
    vh = v.reshape(seq, num_heads, d_k).swapaxes(0, 1).astype(cdt)   # (H, S,  dk)

    # Head-batched scores: (H, TQ, S).  1/sqrt(d_k) already folded into Wq/bq.
    s = jnp.einsum('hqd,hkd->hqk', qh, kh, preferred_element_type=jnp.float32)

    # Softmax over the HEAD axis (dim=1 of (B,H,Sq,Sk) in the PyTorch code).
    m = jnp.max(s, axis=0, keepdims=True)
    e = jnp.exp(s - m)
    denom = jnp.sum(e, axis=0, keepdims=True)
    w = e * pl.reciprocal(denom, approx=True)                 # (H, TQ, S) f32

    # Context: (H, TQ, S) @ (H, S, dk) -> (H, TQ, dk) -> (TQ, D).
    ctx_h = jnp.einsum('hqk,hkd->hqd', w.astype(cdt), vh,
                       preferred_element_type=jnp.float32)
    ctx = ctx_h.swapaxes(0, 1).reshape(tq, dm).astype(cdt)    # (TQ, D)

    out = jnp.dot(ctx, wo_ref[...],
                  preferred_element_type=jnp.float32) + bo_ref[...]
    out_ref[0] = out.astype(out_ref.dtype)

    # TODO(synk): optional `mask` argument of the reference forward is not
    # implemented (mask=None path only).


def _pick_query_tile(seq_len):
    """Query tile so the (H, TQ, S) f32 score block stays well inside VMEM
    (budgeted against v7x's 64 MiB physical / 32 MiB scoped default)."""
    if seq_len <= 512:
        return seq_len
    for t in (512, 256, 128, 64, 32, 16, 8):
        if seq_len % t == 0:
            return t
    return seq_len


def multi_head_attention(x, params, *, num_heads=NUM_HEADS, use_bf16=True,
                         tq=None):
    """x: (B, S, D) float32.

    params: dict of (D, D) weights stored as (in, out) == PyTorch weight.T and
    (D,) biases.
    """
    B, S, D = x.shape
    d_k = D // num_heads
    scale = 1.0 / math.sqrt(float(d_k))

    if tq is None:
        tq = _pick_query_tile(S)
    assert S % tq == 0
    n_q = S // tq
    fuse_q = (n_q == 1)

    cdt = jnp.bfloat16 if use_bf16 else jnp.float32

    # Pack [Wq*scale | Wk | Wv] -> (D, 3D) and [bq*scale | bk | bv] -> (1, 3D).
    wqkv = jnp.concatenate(
        [params["wq"] * scale, params["wk"], params["wv"]], axis=1).astype(cdt)
    bqkv = jnp.concatenate(
        [params["bq"] * scale, params["bk"], params["bv"]]).reshape(1, 3 * D)
    bqkv = bqkv.astype(jnp.float32)
    wo = params["wo"].astype(cdt)
    bo = params["bo"].reshape(1, D).astype(jnp.float32)
    xc = x.astype(cdt)

    kernel = functools.partial(
        _mha_kernel, num_heads=num_heads, d_k=d_k, tq=tq, fuse_q=fuse_q)

    return pl.pallas_call(
        kernel,
        out_shape=jax.ShapeDtypeStruct((B, S, D), x.dtype),
        grid=(B, n_q),
        in_specs=[
            # Full sequence per batch element; block index is constant in qi,
            # so Pallas re-fetches it only when b changes.
            pl.BlockSpec((1, S, D), lambda b, qi: (b, 0, 0)),
            pl.BlockSpec((D, 3 * D), lambda b, qi: (0, 0)),   # Wqkv (packed)
            pl.BlockSpec((1, 3 * D), lambda b, qi: (0, 0)),   # bqkv (packed)
            pl.BlockSpec((D, D), lambda b, qi: (0, 0)),       # Wo
            pl.BlockSpec((1, D), lambda b, qi: (0, 0)),       # bo
        ],
        out_specs=pl.BlockSpec((1, tq, D), lambda b, qi: (b, qi, 0)),
        compiler_params=pltpu.CompilerParams(
            dimension_semantics=("parallel", "parallel"),
            vmem_limit_bytes=48 * 1024 * 1024,   # > v5e 16 MiB default, < v7x 64 MiB
        ),
    )(xc, wqkv, bqkv, wo, bo)


def _ref_forward(x, params, num_heads=NUM_HEADS):
    """Pure-JAX f32 reference mirroring the PyTorch forward exactly."""
    B, S, D = x.shape
    d_k = D // num_heads
    q = x @ params["wq"] + params["bq"]
    k = x @ params["wk"] + params["bk"]
    v = x @ params["wv"] + params["bv"]
    q = q.reshape(B, S, num_heads, d_k).transpose(0, 2, 1, 3)
    k = k.reshape(B, S, num_heads, d_k).transpose(0, 2, 1, 3)
    v = v.reshape(B, S, num_heads, d_k).transpose(0, 2, 1, 3)
    scores = jnp.einsum("bhqd,bhkd->bhqk", q, k) / jnp.sqrt(jnp.float32(d_k))
    weights = jax.nn.softmax(scores, axis=1)   # softmax over heads, like the module
    ctx = jnp.einsum("bhqk,bhkd->bhqd", weights, v)
    ctx = ctx.transpose(0, 2, 1, 3).reshape(B, S, D)
    return ctx @ params["wo"] + params["bo"]


def _init_params(key, d_model):
    """Deterministic init matching nn.Linear default (uniform +-1/sqrt(in))."""
    bound = 1.0 / math.sqrt(d_model)
    keys = jax.random.split(key, 8)

    def u(k, shape):
        return jax.random.uniform(k, shape, jnp.float32, -bound, bound)

    return {
        # weights stored as (in, out) == PyTorch weight.T
        "wq": u(keys[0], (d_model, d_model)), "bq": u(keys[1], (d_model,)),
        "wk": u(keys[2], (d_model, d_model)), "bk": u(keys[3], (d_model,)),
        "wv": u(keys[4], (d_model, d_model)), "bv": u(keys[5], (d_model,)),
        "wo": u(keys[6], (d_model, d_model)), "bo": u(keys[7], (d_model,)),
    }


if __name__ == "__main__":
    key = jax.random.PRNGKey(0)
    k_param, k_x = jax.random.split(key)

    B, S = 2, 8
    params = _init_params(k_param, D_MODEL)
    x = jax.random.normal(k_x, (B, S, D_MODEL), jnp.float32)

    ref = _ref_forward(x, params)

    # f32 MXU operands: tight check (approx reciprocal dominates the error).
    out_f32 = jax.block_until_ready(
        multi_head_attention(x, params, use_bf16=False))
    assert out_f32.shape == (B, S, D_MODEL)
    assert jnp.allclose(out_f32, ref, atol=2e-3, rtol=2e-3), (
        float(jnp.max(jnp.abs(out_f32 - ref))))

    # bf16 MXU operands / f32 accumulation (perf config): relaxed check.
    out_bf16 = jax.block_until_ready(
        multi_head_attention(x, params, use_bf16=True))
    assert out_bf16.shape == (B, S, D_MODEL)
    assert jnp.allclose(out_bf16, ref, atol=2e-2, rtol=2e-2), (
        float(jnp.max(jnp.abs(out_bf16 - ref))))

    print("KERNEL_OK")
</pallas_src>

<mosaic_0001>
module attributes {stable_mosaic.version = 11 : i64} {
  func.func @_mha_kernel(%arg0: i32, %arg1: i32, %arg2: memref<1x8x128xf32, #tpu.memory_space<vmem>>, %arg3: memref<128x384xf32, #tpu.memory_space<vmem>>, %arg4: memref<1x384xf32, #tpu.memory_space<vmem>>, %arg5: memref<128x128xf32, #tpu.memory_space<vmem>>, %arg6: memref<1x128xf32, #tpu.memory_space<vmem>>, %arg7: memref<1x8x128xf32, #tpu.memory_space<vmem>>) attributes {dimension_semantics = [#tpu.dimension_semantics<parallel>, #tpu.dimension_semantics<parallel>], iteration_bounds = array<i64: 2, 1>, scalar_prefetch = 0 : i64, scratch_operands = 0 : i64, tpu.core_type = #tpu.core_type<tc>, window_params = [{transform_indices = @transform_0, window_bounds = array<i64: 1, 8, 128>}, {pipeline_mode = #tpu.pipeline_mode<synchronous>, transform_indices = @transform_1, window_bounds = array<i64: 128, 384>}, {pipeline_mode = #tpu.pipeline_mode<synchronous>, transform_indices = @transform_2, window_bounds = array<i64: 1, 384>}, {pipeline_mode = #tpu.pipeline_mode<synchronous>, transform_indices = @transform_3, window_bounds = array<i64: 128, 128>}, {pipeline_mode = #tpu.pipeline_mode<synchronous>, transform_indices = @transform_4, window_bounds = array<i64: 1, 128>}, {transform_indices = @transform_5, window_bounds = array<i64: 1, 8, 128>}]} {
    %c0 = arith.constant 0 : index
    %c0_0 = arith.constant 0 : index
    %c0_1 = arith.constant 0 : index
    %0 = vector.load %arg2[%c0, %c0_0, %c0_1] : memref<1x8x128xf32, #tpu.memory_space<vmem>>, vector<1x8x128xf32>
    %1 = vector.shape_cast %0 : vector<1x8x128xf32> to vector<8x128xf32>
    %c0_2 = arith.constant 0 : index
    %c0_3 = arith.constant 0 : index
    %2 = vector.load %arg3[%c0_2, %c0_3] : memref<128x384xf32, #tpu.memory_space<vmem>>, vector<128x384xf32>
    %cst = arith.constant dense<0.000000e+00> : vector<8x384xf32>
    %3 = tpu.matmul %1, %2, %cst {dimension_numbers = #tpu.dot_dimension_numbers<[1], [0], [0], [1], [0, 0, 1, 1], [], []>} : vector<8x128xf32>, vector<128x384xf32>, vector<8x384xf32> -> vector<8x384xf32>
    %c0_4 = arith.constant 0 : index
    %c0_5 = arith.constant 0 : index
    %4 = vector.load %arg4[%c0_4, %c0_5] : memref<1x384xf32, #tpu.memory_space<vmem>>, vector<1x384xf32>
    %5 = vector.broadcast %4 : vector<1x384xf32> to vector<8x384xf32>
    %6 = arith.addf %3, %5 : vector<8x384xf32>
    %7 = vector.extract_strided_slice %6 {offsets = [0, 0], sizes = [8, 128], strides = [1, 1]} : vector<8x384xf32> to vector<8x128xf32>
    %8 = vector.extract_strided_slice %6 {offsets = [0, 128], sizes = [8, 128], strides = [1, 1]} : vector<8x384xf32> to vector<8x128xf32>
    %9 = vector.extract_strided_slice %6 {offsets = [0, 256], sizes = [8, 128], strides = [1, 1]} : vector<8x384xf32> to vector<8x128xf32>
    %10 = vector.shape_cast %7 : vector<8x128xf32> to vector<8x8x16xf32>
    %11 = tpu.transpose %10, [1, 0, 2] : vector<8x8x16xf32> -> vector<8x8x16xf32>
    %12 = vector.shape_cast %8 : vector<8x128xf32> to vector<8x8x16xf32>
    %13 = tpu.transpose %12, [1, 0, 2] : vector<8x8x16xf32> -> vector<8x8x16xf32>
    %14 = vector.shape_cast %9 : vector<8x128xf32> to vector<8x8x16xf32>
    %15 = tpu.transpose %14, [1, 0, 2] : vector<8x8x16xf32> -> vector<8x8x16xf32>
    "tpu.trace_start"() <{level = 10 : i32, message = "hqd,hkd->hqk"}> : () -> ()
    %cst_6 = arith.constant dense<0.000000e+00> : vector<8x8x8xf32>
    %16 = tpu.matmul %11, %13, %cst_6 {dimension_numbers = #tpu.dot_dimension_numbers<[2], [2], [1], [1], [0, 0, 0, 1, 1, 1], [0], [0]>} : vector<8x8x16xf32>, vector<8x8x16xf32>, vector<8x8x8xf32> -> vector<8x8x8xf32>
    "tpu.trace_stop"() : () -> ()
    %cst_7 = arith.constant dense<0xFF800000> : vector<8x8xf32>
    %17 = vector.multi_reduction <maximumf>, %16, %cst_7 [0] : vector<8x8x8xf32> to vector<8x8xf32>
    %18 = vector.shape_cast %17 : vector<8x8xf32> to vector<1x8x8xf32>
    %19 = vector.broadcast %18 : vector<1x8x8xf32> to vector<8x8x8xf32>
    %20 = arith.subf %16, %19 : vector<8x8x8xf32>
    %21 = math.exp %20 : vector<8x8x8xf32>
    %cst_8 = arith.constant dense<0.000000e+00> : vector<8x8xf32>
    %22 = vector.multi_reduction <add>, %21, %cst_8 [0] : vector<8x8x8xf32> to vector<8x8xf32>
    %23 = vector.shape_cast %22 : vector<8x8xf32> to vector<1x8x8xf32>
    %24 = tpu.reciprocal %23 {approx = true} : vector<1x8x8xf32> -> vector<1x8x8xf32>
    %25 = vector.broadcast %24 : vector<1x8x8xf32> to vector<8x8x8xf32>
    %26 = arith.mulf %21, %25 : vector<8x8x8xf32>
    "tpu.trace_start"() <{level = 10 : i32, message = "hqk,hkd->hqd"}> : () -> ()
    %cst_9 = arith.constant dense<0.000000e+00> : vector<8x8x16xf32>
    %27 = tpu.matmul %26, %15, %cst_9 {dimension_numbers = #tpu.dot_dimension_numbers<[2], [1], [1], [2], [0, 0, 0, 1, 1, 2], [0], [0]>} : vector<8x8x8xf32>, vector<8x8x16xf32>, vector<8x8x16xf32> -> vector<8x8x16xf32>
    "tpu.trace_stop"() : () -> ()
    %28 = tpu.transpose %27, [1, 0, 2] : vector<8x8x16xf32> -> vector<8x8x16xf32>
    %29 = vector.shape_cast %28 : vector<8x8x16xf32> to vector<8x128xf32>
    %c0_10 = arith.constant 0 : index
    %c0_11 = arith.constant 0 : index
    %30 = vector.load %arg5[%c0_10, %c0_11] : memref<128x128xf32, #tpu.memory_space<vmem>>, vector<128x128xf32>
    %cst_12 = arith.constant dense<0.000000e+00> : vector<8x128xf32>
    %31 = tpu.matmul %29, %30, %cst_12 {dimension_numbers = #tpu.dot_dimension_numbers<[1], [0], [0], [1], [0, 0, 1, 1], [], []>} : vector<8x128xf32>, vector<128x128xf32>, vector<8x128xf32> -> vector<8x128xf32>
    %c0_13 = arith.constant 0 : index
    %c0_14 = arith.constant 0 : index
    %32 = vector.load %arg6[%c0_13, %c0_14] : memref<1x128xf32, #tpu.memory_space<vmem>>, vector<1x128xf32>
    %33 = vector.broadcast %32 : vector<1x128xf32> to vector<8x128xf32>
    %34 = arith.addf %31, %33 : vector<8x128xf32>
    %c0_15 = arith.constant 0 : index
    %c0_16 = arith.constant 0 : index
    %c0_17 = arith.constant 0 : index
    %35 = vector.load %arg7[%c0_15, %c0_16, %c0_17] : memref<1x8x128xf32, #tpu.memory_space<vmem>>, vector<1x8x128xf32>
    %36 = vector.shape_cast %35 : vector<1x8x128xf32> to vector<8x128xf32>
    %37 = vector.shape_cast %34 : vector<8x128xf32> to vector<1x8x128xf32>
    tpu.vector_store %arg7[%c0_15, %c0_16, %c0_17], %37 {strides = array<i32>} : memref<1x8x128xf32, #tpu.memory_space<vmem>>, vector<1x8x128xf32>,
    return
  }
  func.func @transform_0(%arg0: i32, %arg1: i32) -> (i32, i32, i32) {
    %c0_i32 = arith.constant 0 : i32
    %c0_i32_0 = arith.constant 0 : i32
    %c0_i32_1 = arith.constant 0 : i32
    return %arg0, %c0_i32, %c0_i32_0 : i32, i32, i32
  }
  func.func @transform_1(%arg0: i32, %arg1: i32) -> (i32, i32) {
    %c0_i32 = arith.constant 0 : i32
    %c0_i32_0 = arith.constant 0 : i32
    %c0_i32_1 = arith.constant 0 : i32
    return %c0_i32, %c0_i32_0 : i32, i32
  }
  func.func @transform_2(%arg0: i32, %arg1: i32) -> (i32, i32) {
    %c0_i32 = arith.constant 0 : i32
    %c0_i32_0 = arith.constant 0 : i32
    %c0_i32_1 = arith.constant 0 : i32
    return %c0_i32, %c0_i32_0 : i32, i32
  }
  func.func @transform_3(%arg0: i32, %arg1: i32) -> (i32, i32) {
    %c0_i32 = arith.constant 0 : i32
    %c0_i32_0 = arith.constant 0 : i32
    %c0_i32_1 = arith.constant 0 : i32
    return %c0_i32, %c0_i32_0 : i32, i32
  }
  func.func @transform_4(%arg0: i32, %arg1: i32) -> (i32, i32) {
    %c0_i32 = arith.constant 0 : i32
    %c0_i32_0 = arith.constant 0 : i32
    %c0_i32_1 = arith.constant 0 : i32
    return %c0_i32, %c0_i32_0 : i32, i32
  }
  func.func @transform_5(%arg0: i32, %arg1: i32) -> (i32, i32, i32) {
    %c0_i32 = arith.constant 0 : i32
    %c0_i32_0 = arith.constant 0 : i32
    return %arg0, %arg1, %c0_i32 : i32, i32, i32
  }
}

</mosaic_0001>

<llo_original>
// kernel: tpu_custom_call.1
$region0: #{tpu_custom_call.1}
  #allocation0 [shape = 'u32[]', space=smem, size = 0x4, offset = 0x4, fixed_abs, tag = 'smem constant byte address 0x4 - core index']
  #allocation1 [shape = 'u32[144,128]{1,0:T(1,128)}', space=vmem, size = 0x12000, scoped, tag = 'internal scratch']
  %s0 = inlined_call_operand.hbm [shape: f32[2,8,128], index: 0, kind: input, shape index: {}]
  %s1 = inlined_call_operand.hbm [shape: f32[128,384], index: 1, kind: input, shape index: {}]
  %s2 = inlined_call_operand.vmem [shape: f32[1,384], index: 2, kind: input, shape index: {}]
  %s3 = inlined_call_operand.hbm [shape: f32[128,128], index: 3, kind: input, shape index: {}]
  %s4 = inlined_call_operand.vmem [shape: f32[1,128], index: 4, kind: input, shape index: {}]
  %s5 = inlined_call_operand.hbm [shape: f32[2,8,128], index: 5, kind: output, shape index: {}]
  %s6 = sld [smem:[#allocation0]]
  $region65: #{tpu_custom_call.1} parent=0
    _
  %s8 = ssub.s32 1, %s6
  %s9 = scalar_select 0, %s8, %s6
  $region1: #{tpu_custom_call.1} parent=0
    #allocation2 [shape = 'u8[8192]{0}', space=vmem, size = 0x2000, scoped, tag = 'input window, operand 0']
    #allocation3 [shape = 's32[2]{0}', space=sflag, size = 0x8, scoped, tag = 'scoped memory for tpu_custom_call.1']
    #allocation4 [shape = 's32[2]{0}', space=sflag, size = 0x8, scoped, tag = 'scoped memory for tpu_custom_call.1']
    #allocation5 [shape = 'u8[196608]{0}', space=vmem, size = 0x30000, scoped, tag = 'input window, operand 1, single buffered']
    #allocation6 [shape = 's32[1]{0}', space=sflag, size = 0x4, scoped, tag = 'scoped memory for tpu_custom_call.1']
    #allocation7 [shape = 'u8[65536]{0}', space=vmem, size = 0x10000, scoped, tag = 'input window, operand 3, single buffered']
    #allocation8 [shape = 'u8[8192]{0}', space=vmem, size = 0x2000, scoped, tag = 'output window, operand 0']
    %10 = vsyncpa [#allocation3], 0
    %s11 = scalar_lea.sflag [#allocation3], 1
    %12 = vsyncpa %s11, 0
    %13 = vsyncpa [#allocation6], 0
    %14 = vsyncpa [#allocation4], 0
    %s15 = scalar_lea.sflag [#allocation4], 1
    %16 = vsyncpa %s15, 0
    loop: start=0, step=1, limit=4
    $region2: #{tpu_custom_call.1} parent=1 // loop_pre_header
      _
    $region3: #{tpu_custom_call.1} parent=1 // loop_header
      %s18 = sphi 0, %s22
      %p19 = scmp.ge.s32.totalorder %s18, 4
      %s25 = sphi 0, %s37
      %s26 = sphi 0, %s33
      %s27 = sphi 0, %s25
      %s28 = sphi 0, %s26
      %s29 = sphi 0, %s27
      %s30 = sphi 0, %s28
      %s40 = sphi 0, %s42
      %s43 = sphi 0, %s40
      %s44 = sphi 0, %s43
      %s60 = sphi 0, %s44
      %s64 = sphi 0, %s64
      %s66 = sphi 0, %s64
      %s67 = sphi 0, %s66
      %s81 = sphi 0, %s67
      %s85 = sphi 0, %s85
      %s87 = sphi 0, %s85
      %s88 = sphi 0, %s87
      %s102 = sphi 0, %s88
      %s106 = sphi 0, %s106
      %s108 = sphi 0, %s106
      %s109 = sphi 0, %s108
      %s123 = sphi 0, %s109
      %s127 = sphi 0, %s127
      %s129 = sphi 0, %s127
      %s130 = sphi 0, %s129
      %s144 = sphi 0, %s130
      %s152 = sphi 0, %s154
      %s155 = sphi 0, %s152
      %s156 = sphi 0, %s155
      %s172 = sphi 0, %s156
    $region4: #{tpu_custom_call.1} parent=1 // loop_header_branch
      %21 = sbr.rel (%p19) target = $region8
    $region5: #{tpu_custom_call.1} parent=1 // loop_body
      %s23 = ssub.s32 %s18, 1
      %s24 = ssub.s32 %s18, 2
      %s31 = sadd.s32 1, %s26
      %p32 = scmp.ge.s32.totalorder %s31, 1
      %s33 = scalar_select %p32, 0, %s31
      %s34 = sadd.s32 1, %s25
      %s35 = scalar_select %p32, %s34, %s25
      %p36 = scmp.ge.s32.totalorder %s35, 2
      %s37 = scalar_select %p36, 0, %s35
      %s38 = ssub.s32 %s25, %s37
      %p39 = scmp.eq.s32.totalorder %s38, 0
      %s41 = sadd.s32 %s40, 1
      %s42 = scalar_select %p39, %s40, %s41
      %p45 = pneg %p39
      %p46 = scmp.eq.s32.totalorder %s18, 1
      %p47 = por %p45, %p46
      %p48 = scmp.ne.s32.totalorder %s40, %s43
      %p49 = scmp.eq.s32.totalorder %s18, 0
      %p50 = por %p48, %p49
      %p51 = scmp.ne.s32.totalorder %s40, %s43
      %p52 = scmp.eq.s32.totalorder %s23, 1
      %p53 = por %p51, %p52
      %p54 = scmp.ne.s32.totalorder %s43, %s44
      %p55 = scmp.eq.s32.totalorder %s23, 0
      %p56 = por %p54, %p55
      %p57 = scmp.ne.s32.totalorder %s43, %s44
      %p58 = scmp.eq.s32.totalorder %s24, 1
      %p59 = por %p57, %p58
      %p61 = scmp.ne.s32.totalorder %s44, %s60
      %p62 = scmp.eq.s32.totalorder %s24, 0
      %p63 = por %p61, %p62
      %s65 = sadd.s32 %s64, 1
      %p68 = scmp.eq.s32.totalorder %s18, 1
      %p69 = scmp.ne.s32.totalorder %s64, %s66
      %p70 = scmp.eq.s32.totalorder %s18, 0
      %p71 = por %p69, %p70
      %p72 = scmp.ne.s32.totalorder %s64, %s66
      %p73 = scmp.eq.s32.totalorder %s23, 1
      %p74 = por %p72, %p73
      %p75 = scmp.ne.s32.totalorder %s66, %s67
      %p76 = scmp.eq.s32.totalorder %s23, 0
      %p77 = por %p75, %p76
      %p78 = scmp.ne.s32.totalorder %s66, %s67
      %p79 = scmp.eq.s32.totalorder %s24, 1
      %p80 = por %p78, %p79
      %p82 = scmp.ne.s32.totalorder %s67, %s81
      %p83 = scmp.eq.s32.totalorder %s24, 0
      %p84 = por %p82, %p83
      %s86 = sadd.s32 %s85, 1
      %p89 = scmp.eq.s32.totalorder %s18, 1
      %p90 = scmp.ne.s32.totalorder %s85, %s87
      %p91 = scmp.eq.s32.totalorder %s18, 0
      %p92 = por %p90, %p91
      %p93 = scmp.ne.s32.totalorder %s85, %s87
      %p94 = scmp.eq.s32.totalorder %s23, 1
      %p95 = por %p93, %p94
      %p96 = scmp.ne.s32.totalorder %s87, %s88
      %p97 = scmp.eq.s32.totalorder %s23, 0
      %p98 = por %p96, %p97
      %p99 = scmp.ne.s32.totalorder %s87, %s88
      %p100 = scmp.eq.s32.totalorder %s24, 1
      %p101 = por %p99, %p100
      %p103 = scmp.ne.s32.totalorder %s88, %s102
      %p104 = scmp.eq.s32.totalorder %s24, 0
      %p105 = por %p103, %p104
      %s107 = sadd.s32 %s106, 1
      %p110 = scmp.eq.s32.totalorder %s18, 1
      %p111 = scmp.ne.s32.totalorder %s106, %s108
      %p112 = scmp.eq.s32.totalorder %s18, 0
      %p113 = por %p111, %p112
      %p114 = scmp.ne.s32.totalorder %s106, %s108
      %p115 = scmp.eq.s32.totalorder %s23, 1
      %p116 = por %p114, %p115
      %p117 = scmp.ne.s32.totalorder %s108, %s109
      %p118 = scmp.eq.s32.totalorder %s23, 0
      %p119 = por %p117, %p118
      %p120 = scmp.ne.s32.totalorder %s108, %s109
      %p121 = scmp.eq.s32.totalorder %s24, 1
      %p122 = por %p120, %p121
      %p124 = scmp.ne.s32.totalorder %s109, %s123
      %p125 = scmp.eq.s32.totalorder %s24, 0
      %p126 = por %p124, %p125
      %s128 = sadd.s32 %s127, 1
      %p131 = scmp.eq.s32.totalorder %s18, 1
      %p132 = scmp.ne.s32.totalorder %s127, %s129
      %p133 = scmp.eq.s32.totalorder %s18, 0
      %p134 = por %p132, %p133
      %p135 = scmp.ne.s32.totalorder %s127, %s129
      %p136 = scmp.eq.s32.totalorder %s23, 1
      %p137 = por %p135, %p136
      %p138 = scmp.ne.s32.totalorder %s129, %s130
      %p139 = scmp.eq.s32.totalorder %s23, 0
      %p140 = por %p138, %p139
      %p141 = scmp.ne.s32.totalorder %s129, %s130
      %p142 = scmp.eq.s32.totalorder %s24, 1
      %p143 = por %p141, %p142
      %p145 = scmp.ne.s32.totalorder %s130, %s144
      %p146 = scmp.eq.s32.totalorder %s24, 0
      %p147 = por %p145, %p146
      %s148 = ssub.s32 %s25, %s37
      %s149 = ssub.s32 %s26, %s33
      %s150 = sor.u32 %s148, %s149
      %p151 = scmp.eq.s32.totalorder %s150, 0
      %s153 = sadd.s32 %s152, 1
      %s154 = scalar_select %p151, %s152, %s153
      %p157 = pneg %p151
      %p158 = scmp.eq.s32.totalorder %s18, 1
      %p159 = por %p157, %p158
      %p160 = scmp.ne.s32.totalorder %s152, %s155
      %p161 = scmp.eq.s32.totalorder %s18, 0
      %p162 = por %p160, %p161
      %p163 = scmp.ne.s32.totalorder %s152, %s155
      %p164 = scmp.eq.s32.totalorder %s23, 1
      %p165 = por %p163, %p164
      %p166 = scmp.ne.s32.totalorder %s155, %s156
      %p167 = scmp.eq.s32.totalorder %s23, 0
      %p168 = por %p166, %p167
      %p169 = scmp.ne.s32.totalorder %s155, %s156
      %p170 = scmp.eq.s32.totalorder %s24, 1
      %p171 = por %p169, %p170
      %p173 = scmp.ne.s32.totalorder %s156, %s172
      %p174 = scmp.eq.s32.totalorder %s24, 0
      %p175 = por %p173, %p174
      %p176 = scmp.le.s32.totalorder 1, %s18
      %p177 = scmp.lt.s32.totalorder %s18, 3
      %p178 = pnand %p176, %p177
      %p179 = pneg %p178
      // Predicated region
      $region9: #{tpu_custom_call.1} parent=5 // pred_check
        _
      $region10: #{tpu_custom_call.1} parent=5 // pred_check_branch
        %181 = sbr.rel (%p178) target = $region12
      $region11: #{tpu_custom_call.1} parent=5 // pred_region
        %s182 = ssub.s32 %s18, 1
        // Predicated region
        $region13: #{tpu_custom_call.1} parent=11 // pred_check
          %p183 = pneg %p77
        $region14: #{tpu_custom_call.1} parent=11 // pred_check_branch
          %185 = sbr.rel (%p183) target = $region16
        $region15: #{tpu_custom_call.1} parent=11 // pred_region
          %s187 = ssub.s32 6144, 6144
          %188 = vsyncadd [#allocation6], %s187
          %s189 = sshll.u32 [#allocation5], 4
          %s190 = int_to_ptr.vmem [resolvable:$true] %s189
          %195 = dma.hbm_to_vmem [thread:$0]  %s1, 6144, %s190, [#allocation6], 384, 384, 24
        $region16: #{tpu_custom_call.1} parent=11 // pred_fallthru
          _
        // Predicated region
        $region17: #{tpu_custom_call.1} parent=11 // pred_check
          %p196 = pneg %p98
        $region18: #{tpu_custom_call.1} parent=11 // pred_check_branch
          %198 = sbr.rel (%p196) target = $region20
        $region19: #{tpu_custom_call.1} parent=11 // pred_region
          _
        $region20: #{tpu_custom_call.1} parent=11 // pred_fallthru
          _
        // Predicated region
        $region21: #{tpu_custom_call.1} parent=11 // pred_check
          %p199 = pneg %p119
        $region22: #{tpu_custom_call.1} parent=11 // pred_check_branch
          %201 = sbr.rel (%p199) target = $region24
        $region23: #{tpu_custom_call.1} parent=11 // pred_region
          %s203 = ssub.s32 2048, 2048
          %204 = vsyncadd [#allocation6], %s203
          %s205 = sshll.u32 [#allocation7], 4
          %s206 = int_to_ptr.vmem [resolvable:$true] %s205
          %211 = dma.hbm_to_vmem [thread:$0]  %s3, 2048, %s206, [#allocation6], 128, 128, 8
        $region24: #{tpu_custom_call.1} parent=11 // pred_fallthru
          _
        // Predicated region
        $region25: #{tpu_custom_call.1} parent=11 // pred_check
          %p212 = pneg %p140
        $region26: #{tpu_custom_call.1} parent=11 // pred_check_branch
          %214 = sbr.rel (%p212) target = $region28
        $region27: #{tpu_custom_call.1} parent=11 // pred_region
          _
        $region28: #{tpu_custom_call.1} parent=11 // pred_fallthru
          _
      $region12: #{tpu_custom_call.1} parent=5 // pred_fallthru
        _
      %p215 = scmp.lt.s32.totalorder %s18, 2
      // Predicated region
      $region29: #{tpu_custom_call.1} parent=5 // pred_check
        %p216 = pneg %p215
      $region30: #{tpu_custom_call.1} parent=5 // pred_check_branch
        %218 = sbr.rel (%p216) target = $region32
      $region31: #{tpu_custom_call.1} parent=5 // pred_region
        // Predicated region
        $region33: #{tpu_custom_call.1} parent=31 // pred_check
          %p219 = pneg %p50
        $region34: #{tpu_custom_call.1} parent=31 // pred_check_branch
          %221 = sbr.rel (%p219) target = $region36
        $region35: #{tpu_custom_call.1} parent=31 // pred_region
          %s222 = sand.u32 %s40, 1
          %s223 = scalar_lea.sflag [#allocation3], %s222
          %s224 = sand.u32 %s40, 1
          %s225 = smul.addr %s224, 8
          %s226 = scalar_lea.vmem [#allocation2], %s225
          %s228 = ssub.s32 128, 128
          %229 = vsyncadd %s223, %s228
          %s230 = smul.addr %s25, 128
          %s231 = scalar_lea.hbm %s0, %s230
          %s233 = sshll.u32 %s226, 4
          %s234 = int_to_ptr.vmem [resolvable:$true] %s233
          %236 = dma.hbm_to_vmem [thread:$0]  %s231, 128, %s234, %s223
        $region36: #{tpu_custom_call.1} parent=31 // pred_fallthru
          _
      $region32: #{tpu_custom_call.1} parent=5 // pred_fallthru
        _
      %p237 = scmp.le.s32.totalorder 1, %s18
      %p238 = scmp.lt.s32.totalorder %s18, 3
      %p239 = pnand %p237, %p238
      %p240 = pneg %p239
      // Predicated region
      $region37: #{tpu_custom_call.1} parent=5 // pred_check
        _
      $region38: #{tpu_custom_call.1} parent=5 // pred_check_branch
        %242 = sbr.rel (%p239) target = $region40
      $region39: #{tpu_custom_call.1} parent=5 // pred_region
        %s243 = ssub.s32 %s18, 1
        %s244 = sand.u32 %s43, 1
        %s245 = scalar_lea.sflag [#allocation3], %s244
        %s246 = sand.u32 %s43, 1
        %s247 = smul.addr %s246, 8
        %s248 = scalar_lea.vmem [#allocation2], %s247
        // Predicated region
        $region41: #{tpu_custom_call.1} parent=39 // pred_check
          %p249 = pneg %p56
        $region42: #{tpu_custom_call.1} parent=39 // pred_check_branch
          %251 = sbr.rel (%p249) target = $region44
        $region43: #{tpu_custom_call.1} parent=39 // pred_region
          %252 = dma.done %s245, 128
        $region44: #{tpu_custom_call.1} parent=39 // pred_fallthru
          _
        // Predicated region
        $region45: #{tpu_custom_call.1} parent=39 // pred_check
          %p253 = pneg %p77
        $region46: #{tpu_custom_call.1} parent=39 // pred_check_branch
          %255 = sbr.rel (%p253) target = $region48
        $region47: #{tpu_custom_call.1} parent=39 // pred_region
          %256 = dma.done [#allocation6], 6144
        $region48: #{tpu_custom_call.1} parent=39 // pred_fallthru
          _
        // Predicated region
        $region49: #{tpu_custom_call.1} parent=39 // pred_check
          %p257 = pneg %p119
        $region50: #{tpu_custom_call.1} parent=39 // pred_check_branch
          %259 = sbr.rel (%p257) target = $region52
        $region51: #{tpu_custom_call.1} parent=39 // pred_region
          %260 = dma.done [#allocation6], 2048
        $region52: #{tpu_custom_call.1} parent=39 // pred_fallthru
          _
        %s261 = sand.u32 %s43, 1
        %s262 = scalar_lea.sflag [#allocation3], %s261
        %s263 = sand.u32 %s43, 1
        %s264 = smul.addr %s263, 8
        %s265 = scalar_lea.vmem [#allocation2], %s264
        %p266 = pneg %p56
        %p267 = pneg %p53
        %p268 = pneg %p77
        %p269 = pneg %p74
        %p270 = pneg %p98
        %p271 = pneg %p95
        %p272 = pneg %p119
        %p273 = pneg %p116
        %p274 = pneg %p140
        %p275 = pneg %p137
        %p276 = pneg %p168
        %p277 = pneg %p165
        %s278 = sand.u32 %s155, 1
        %s279 = scalar_lea.sflag [#allocation4], %s278
        %s280 = sand.u32 %s155, 1
        %s281 = smul.addr %s280, 8
        %s282 = scalar_lea.vmem [#allocation8], %s281
        %v283 = vld [vmem:[%s248] sm:$0xff]
        %v284 = vld [vmem:[#allocation5] sm:$0xff]
        %v285 = vld [vmem:[#allocation5 + $0x8] sm:$0xff]
        %v286 = vld [vmem:[#allocation5 + $0x10] sm:$0xff]
        %v287 = vld [vmem:[#allocation5 + $0x18] sm:$0xff]
        %v288 = vld [vmem:[#allocation5 + $0x20] sm:$0xff]
        %v289 = vld [vmem:[#allocation5 + $0x28] sm:$0xff]
        %v290 = vld [vmem:[#allocation5 + $0x30] sm:$0xff]
        %v291 = vld [vmem:[#allocation5 + $0x38] sm:$0xff]
        %v292 = vld [vmem:[#allocation5 + $0x40] sm:$0xff]
        %v293 = vld [vmem:[#allocation5 + $0x48] sm:$0xff]
        %v294 = vld [vmem:[#allocation5 + $0x50] sm:$0xff]
        %v295 = vld [vmem:[#allocation5 + $0x58] sm:$0xff]
        %v296 = vld [vmem:[#allocation5 + $0x60] sm:$0xff]
        %v297 = vld [vmem:[#allocation5 + $0x68] sm:$0xff]
        %v298 = vld [vmem:[#allocation5 + $0x70] sm:$0xff]
        %v299 = vld [vmem:[#allocation5 + $0x78] sm:$0xff]
        %v300 = vld [vmem:[#allocation5 + $0x80] sm:$0xff]
        %v301 = vld [vmem:[#allocation5 + $0x88] sm:$0xff]
        %v302 = vld [vmem:[#allocation5 + $0x90] sm:$0xff]
        %v303 = vld [vmem:[#allocation5 + $0x98] sm:$0xff]
        %v304 = vld [vmem:[#allocation5 + $0xa0] sm:$0xff]
        %v305 = vld [vmem:[#allocation5 + $0xa8] sm:$0xff]
        %v306 = vld [vmem:[#allocation5 + $0xb0] sm:$0xff]
        %v307 = vld [vmem:[#allocation5 + $0xb8] sm:$0xff]
        %v308 = vld [vmem:[#allocation5 + $0xc0] sm:$0xff]
        %v309 = vld [vmem:[#allocation5 + $0xc8] sm:$0xff]
        %v310 = vld [vmem:[#allocation5 + $0xd0] sm:$0xff]
        %v311 = vld [vmem:[#allocation5 + $0xd8] sm:$0xff]
        %v312 = vld [vmem:[#allocation5 + $0xe0] sm:$0xff]
        %v313 = vld [vmem:[#allocation5 + $0xe8] sm:$0xff]
        %v314 = vld [vmem:[#allocation5 + $0xf0] sm:$0xff]
        %v315 = vld [vmem:[#allocation5 + $0xf8] sm:$0xff]
        %v316 = vld [vmem:[#allocation5 + $0x100] sm:$0xff]
        %v317 = vld [vmem:[#allocation5 + $0x108] sm:$0xff]
        %v318 = vld [vmem:[#allocation5 + $0x110] sm:$0xff]
        %v319 = vld [vmem:[#allocation5 + $0x118] sm:$0xff]
        %v320 = vld [vmem:[#allocation5 + $0x120] sm:$0xff]
        %v321 = vld [vmem:[#allocation5 + $0x128] sm:$0xff]
        %v322 = vld [vmem:[#allocation5 + $0x130] sm:$0xff]
        %v323 = vld [vmem:[#allocation5 + $0x138] sm:$0xff]
        %v324 = vld [vmem:[#allocation5 + $0x140] sm:$0xff]
        %v325 = vld [vmem:[#allocation5 + $0x148] sm:$0xff]
        %v326 = vld [vmem:[#allocation5 + $0x150] sm:$0xff]
        %v327 = vld [vmem:[#allocation5 + $0x158] sm:$0xff]
        %v328 = vld [vmem:[#allocation5 + $0x160] sm:$0xff]
        %v329 = vld [vmem:[#allocation5 + $0x168] sm:$0xff]
        %v330 = vld [vmem:[#allocation5 + $0x170] sm:$0xff]
        %v331 = vld [vmem:[#allocation5 + $0x178] sm:$0xff]
        %v332 = vld [vmem:[%s2] sm:$0x7]
        %v334 = vlaneseq
        %v335 = vshrl.u32 %v334, 7
        %v336 = vsub.s32 0, %v335
        %v337 = vrot.slane %v332, %v336
        %v338 = vlaneseq
        %v339 = vshrl.u32 %v338, 7
        %v340 = vsub.s32 1, %v339
        %v341 = vrot.slane %v332, %v340
        %v342 = vlaneseq
        %v343 = vshrl.u32 %v342, 7
        %v344 = vsub.s32 2, %v343
        %v345 = vrot.slane %v332, %v344
        %349 = vmatprep.subr.mxu0 %v285
        %350 = vmatpush1.msra.mxu0 %v284
        %351 = vmatprep.subr.mxu0 %v288
        %352 = vmatpush1.msra.mxu0 %v287
        %353 = vmatprep.subr.mxu0 %v291
        %354 = vmatpush1.msra.mxu0 %v290
        %355 = vmatprep.subr.mxu0 %v294
        %356 = vmatpush1.msra.mxu0 %v293
        %357 = vmatprep.subr.mxu0 %v297
        %358 = vmatpush1.msra.mxu0 %v296
        %359 = vmatprep.subr.mxu0 %v300
        %360 = vmatpush1.msra.mxu0 %v299
        %361 = vmatprep.subr.mxu0 %v303
        %362 = vmatpush1.msra.mxu0 %v302
        %363 = vmatprep.subr.mxu0 %v306
        %364 = vmatpush1.msra.mxu0 %v305
        %365 = vmatprep.subr.mxu0 %v309
        %366 = vmatpush1.msra.mxu0 %v308
        %367 = vmatprep.subr.mxu0 %v312
        %368 = vmatpush1.msra.mxu0 %v311
        %369 = vmatprep.subr.mxu0 %v315
        %370 = vmatpush1.msra.mxu0 %v314
        %371 = vmatprep.subr.mxu0 %v318
        %372 = vmatpush1.msra.mxu0 %v317
        %373 = vmatprep.subr.mxu0 %v321
        %374 = vmatpush1.msra.mxu0 %v320
        %375 = vmatprep.subr.mxu0 %v324
        %376 = vmatpush1.msra.mxu0 %v323
        %377 = vmatprep.subr.mxu0 %v327
        %378 = vmatpush1.msra.mxu0 %v326
        %379 = vmatprep.subr.mxu0 %v330
        %380 = vmatpush1.msra.mxu0 %v329
        %381 = vmatprep.subr.mxu0 0.0
        %382 = vmatpush1.msra.mxu0 0.0
        %383 = vmatprep.subr.mxu0 0.0
        %384 = vmatpush1.msra.mxu0 0.0
        %385 = vmatprep.subr.mxu0 0.0
        %386 = vmatpush1.msra.mxu0 0.0
        %387 = vmatprep.subr.mxu0 0.0
        %388 = vmatpush1.msra.mxu0 0.0
        %389 = vmatprep.subr.mxu0 0.0
        %390 = vmatpush1.msra.mxu0 0.0
        %391 = vmatprep.subr.mxu0 0.0
        %392 = vmatpush1.msra.mxu0 0.0
        %393 = vmatprep.subr.mxu0 0.0
        %394 = vmatpush1.msra.mxu0 0.0
        %395 = vmatprep.subr.mxu0 0.0
        %396 = vmatpush1.msra.mxu0 0.0
        %397 = vmatprep.subr.mxu0 0.0
        %398 = vmatpush1.msra.mxu0 0.0
        %399 = vmatprep.subr.mxu0 0.0
        %400 = vmatpush1.msra.mxu0 0.0
        %401 = vmatprep.subr.mxu0 0.0
        %402 = vmatpush1.msra.mxu0 0.0
        %403 = vmatprep.subr.mxu0 0.0
        %404 = vmatpush1.msra.mxu0 0.0
        %405 = vmatprep.subr.mxu0 0.0
        %406 = vmatpush1.msra.mxu0 0.0
        %407 = vmatprep.subr.mxu0 0.0
        %408 = vmatpush1.msra.mxu0 0.0
        %409 = vmatprep.subr.mxu0 0.0
        %410 = vmatpush1.msra.mxu0 0.0
        %411 = vmatprep.subr.mxu0 0.0
        %412 = vmatpush1.msra.mxu0 0.0
        %413 = vmatprep.mubr.f32.mxu0 0.0
        %414 = vmatmul.mubr.f32.gmra.mrb[0].mxu0 %v283
        %v415 = vpop.f32.mrb[0].mxu0
        %v416 = vadd.f32 %v337, %v415
        %v417 = vpop.f32.mrb[0].mxu0
        %v418 = vadd.f32 %v341, %v417
        %419 = vdwg.mxu0
        %420 = vmatprep.subr.mxu0 0.0
        %421 = vmatpush1.msra.mxu0 %v286
        %422 = vmatprep.subr.mxu0 0.0
        %423 = vmatpush1.msra.mxu0 %v289
        %424 = vmatprep.subr.mxu0 0.0
        %425 = vmatpush1.msra.mxu0 %v292
        %426 = vmatprep.subr.mxu0 0.0
        %427 = vmatpush1.msra.mxu0 %v295
        %428 = vmatprep.subr.mxu0 0.0
        %429 = vmatpush1.msra.mxu0 %v298
        %430 = vmatprep.subr.mxu0 0.0
        %431 = vmatpush1.msra.mxu0 %v301
        %432 = vmatprep.subr.mxu0 0.0
        %433 = vmatpush1.msra.mxu0 %v304
        %434 = vmatprep.subr.mxu0 0.0
        %435 = vmatpush1.msra.mxu0 %v307
        %436 = vmatprep.subr.mxu0 0.0
        %437 = vmatpush1.msra.mxu0 %v310
        %438 = vmatprep.subr.mxu0 0.0
        %439 = vmatpush1.msra.mxu0 %v313
        %440 = vmatprep.subr.mxu0 0.0
        %441 = vmatpush1.msra.mxu0 %v316
        %442 = vmatprep.subr.mxu0 0.0
        %443 = vmatpush1.msra.mxu0 %v319
        %444 = vmatprep.subr.mxu0 0.0
        %445 = vmatpush1.msra.mxu0 %v322
        %446 = vmatprep.subr.mxu0 0.0
        %447 = vmatpush1.msra.mxu0 %v325
        %448 = vmatprep.subr.mxu0 0.0
        %449 = vmatpush1.msra.mxu0 %v328
        %450 = vmatprep.subr.mxu0 0.0
        %451 = vmatpush1.msra.mxu0 %v331
        %452 = vmatprep.subr.mxu0 0.0
        %453 = vmatpush1.msra.mxu0 0.0
        %454 = vmatprep.subr.mxu0 0.0
        %455 = vmatpush1.msra.mxu0 0.0
        %456 = vmatprep.subr.mxu0 0.0
        %457 = vmatpush1.msra.mxu0 0.0
        %458 = vmatprep.subr.mxu0 0.0
        %459 = vmatpush1.msra.mxu0 0.0
        %460 = vmatprep.subr.mxu0 0.0
        %461 = vmatpush1.msra.mxu0 0.0
        %462 = vmatprep.subr.mxu0 0.0
        %463 = vmatpush1.msra.mxu0 0.0
        %464 = vmatprep.subr.mxu0 0.0
        %465 = vmatpush1.msra.mxu0 0.0
        %466 = vmatprep.subr.mxu0 0.0
        %467 = vmatpush1.msra.mxu0 0.0
        %468 = vmatprep.subr.mxu0 0.0
        %469 = vmatpush1.msra.mxu0 0.0
        %470 = vmatprep.subr.mxu0 0.0
        %471 = vmatpush1.msra.mxu0 0.0
        %472 = vmatprep.subr.mxu0 0.0
        %473 = vmatpush1.msra.mxu0 0.0
        %474 = vmatprep.subr.mxu0 0.0
        %475 = vmatpush1.msra.mxu0 0.0
        %476 = vmatprep.subr.mxu0 0.0
        %477 = vmatpush1.msra.mxu0 0.0
        %478 = vmatprep.subr.mxu0 0.0
        %479 = vmatpush1.msra.mxu0 0.0
        %480 = vmatprep.subr.mxu0 0.0
        %481 = vmatpush1.msra.mxu0 0.0
        %482 = vmatprep.subr.mxu0 0.0
        %483 = vmatpush1.msra.mxu0 0.0
        %484 = vmatprep.mubr.f32.mxu0 0.0
        %485 = vmatmul.mubr.f32.gmra.mrb[0].mxu0 %v283
        %v486 = vpop.f32.mrb[0].mxu0
        %v487 = vadd.f32 %v345, %v486
        %v488 = vpop.f32.mrb[0].mxu0
        %489 = vdwg.mxu0
        %491 = vrot.lane.b32.xlu0 %v416, 112
        %v492 = vpop.permute.xlu0 %491
        %494 = vrot.lane.b32.xlu0 %v416, 96
        %v495 = vpop.permute.xlu0 %494
        %497 = vrot.lane.b32.xlu0 %v416, 80
        %v498 = vpop.permute.xlu0 %497
        %500 = vrot.lane.b32.xlu0 %v416, 64
        %v501 = vpop.permute.xlu0 %500
        %503 = vrot.lane.b32.xlu0 %v416, 48
        %v504 = vpop.permute.xlu0 %503
        %506 = vrot.lane.b32.xlu0 %v416, 32
        %v507 = vpop.permute.xlu0 %506
        %509 = vrot.lane.b32.xlu0 %v416, 16
        %v510 = vpop.permute.xlu0 %509
        %v512 = vcombine.low %v416, %v495
        %v513 = vcombine.high %v416, %v495
        %v515 = vunpack.c.l.s4 1983009808
        %v516 = vunpack.c.0.s8 %v515
        %v517 = vlaneseq
        %v518 = vshrl.u32 %v517, 7
        %v519 = vsub.s32 %v516, %v518
        %v520 = vrot.slane %v512, %v519
        %v522 = vunpack.c.l.s4 1983009808
        %v523 = vunpack.c.0.s8 %v522
        %v524 = vlaneseq
        %v525 = vshrl.u32 %v524, 7
        %v526 = vsub.s32 %v523, %v525
        %v527 = vrot.slane %v513, %v526
        %v528 = vcombine.low %v492, %v498
        %v529 = vcombine.high %v492, %v498
        %v531 = vunpack.c.l.s4 1983009808
        %v532 = vunpack.c.0.s8 %v531
        %v533 = vlaneseq
        %v534 = vshrl.u32 %v533, 7
        %v535 = vsub.s32 %v532, %v534
        %v536 = vrot.slane %v528, %v535
        %v538 = vunpack.c.l.s4 1983009808
        %v539 = vunpack.c.0.s8 %v538
        %v540 = vlaneseq
        %v541 = vshrl.u32 %v540, 7
        %v542 = vsub.s32 %v539, %v541
        %v543 = vrot.slane %v529, %v542
        %v544 = vcombine.low %v501, %v507
        %v545 = vcombine.high %v501, %v507
        %v547 = vunpack.c.l.s4 1983009808
        %v548 = vunpack.c.0.s8 %v547
        %v549 = vlaneseq
        %v550 = vshrl.u32 %v549, 7
        %v551 = vsub.s32 %v548, %v550
        %v552 = vrot.slane %v544, %v551
        %v554 = vunpack.c.l.s4 1983009808
        %v555 = vunpack.c.0.s8 %v554
        %v556 = vlaneseq
        %v557 = vshrl.u32 %v556, 7
        %v558 = vsub.s32 %v555, %v557
        %v559 = vrot.slane %v545, %v558
        %v560 = vcombine.low %v504, %v510
        %v561 = vcombine.high %v504, %v510
        %v563 = vunpack.c.l.s4 1983009808
        %v564 = vunpack.c.0.s8 %v563
        %v565 = vlaneseq
        %v566 = vshrl.u32 %v565, 7
        %v567 = vsub.s32 %v564, %v566
        %v568 = vrot.slane %v560, %v567
        %v570 = vunpack.c.l.s4 1983009808
        %v571 = vunpack.c.0.s8 %v570
        %v572 = vlaneseq
        %v573 = vshrl.u32 %v572, 7
        %v574 = vsub.s32 %v571, %v573
        %v575 = vrot.slane %v561, %v574
        %v576 = vcombine.low %v520, %v536
        %v577 = vcombine.high %v520, %v536
        %v579 = vunpack.c.l.s4 1934713408
        %v580 = vunpack.c.0.s8 %v579
        %v581 = vlaneseq
        %v582 = vshrl.u32 %v581, 7
        %v583 = vsub.s32 %v580, %v582
        %v584 = vrot.slane %v576, %v583
        %v586 = vunpack.c.l.s4 1934713408
        %v587 = vunpack.c.0.s8 %v586
        %v588 = vlaneseq
        %v589 = vshrl.u32 %v588, 7
        %v590 = vsub.s32 %v587, %v589
        %v591 = vrot.slane %v577, %v590
        %v592 = vcombine.low %v527, %v543
        %v593 = vcombine.high %v527, %v543
        %v595 = vunpack.c.l.s4 1934713408
        %v596 = vunpack.c.0.s8 %v595
        %v597 = vlaneseq
        %v598 = vshrl.u32 %v597, 7
        %v599 = vsub.s32 %v596, %v598
        %v600 = vrot.slane %v592, %v599
        %v602 = vunpack.c.l.s4 1934713408
        %v603 = vunpack.c.0.s8 %v602
        %v604 = vlaneseq
        %v605 = vshrl.u32 %v604, 7
        %v606 = vsub.s32 %v603, %v605
        %v607 = vrot.slane %v593, %v606
        %v608 = vcombine.low %v552, %v568
        %v609 = vcombine.high %v552, %v568
        %v611 = vunpack.c.l.s4 1934713408
        %v612 = vunpack.c.0.s8 %v611
        %v613 = vlaneseq
        %v614 = vshrl.u32 %v613, 7
        %v615 = vsub.s32 %v612, %v614
        %v616 = vrot.slane %v608, %v615
        %v618 = vunpack.c.l.s4 1934713408
        %v619 = vunpack.c.0.s8 %v618
        %v620 = vlaneseq
        %v621 = vshrl.u32 %v620, 7
        %v622 = vsub.s32 %v619, %v621
        %v623 = vrot.slane %v609, %v622
        %v624 = vcombine.low %v559, %v575
        %v625 = vcombine.high %v559, %v575
        %v627 = vunpack.c.l.s4 1934713408
        %v628 = vunpack.c.0.s8 %v627
        %v629 = vlaneseq
        %v630 = vshrl.u32 %v629, 7
        %v631 = vsub.s32 %v628, %v630
        %v632 = vrot.slane %v624, %v631
        %v634 = vunpack.c.l.s4 1934713408
        %v635 = vunpack.c.0.s8 %v634
        %v636 = vlaneseq
        %v637 = vshrl.u32 %v636, 7
        %v638 = vsub.s32 %v635, %v637
        %v639 = vrot.slane %v625, %v638
        %v640 = vcombine.low %v584, %v616
        %v641 = vcombine.high %v584, %v616
        %v642 = vcombine.low %v591, %v623
        %v643 = vcombine.high %v591, %v623
        %v644 = vcombine.low %v600, %v632
        %v645 = vcombine.high %v600, %v632
        %v646 = vcombine.low %v607, %v639
        %v647 = vcombine.high %v607, %v639
        %v648 = vcombine.low %v640, %v642
        %v649 = vcombine.high %v640, %v642
        %v651 = vunpack.c.l.s4 1983009808
        %v652 = vunpack.c.0.s8 %v651
        %v653 = vlaneseq
        %v654 = vshrl.u32 %v653, 7
        %v655 = vsub.s32 %v652, %v654
        %v656 = vrot.slane %v648, %v655
        %v658 = vunpack.c.l.s4 1983009808
        %v659 = vunpack.c.0.s8 %v658
        %v660 = vlaneseq
        %v661 = vshrl.u32 %v660, 7
        %v662 = vsub.s32 %v659, %v661
        %v663 = vrot.slane %v649, %v662
        %v664 = vcombine.low %v641, %v643
        %v665 = vcombine.high %v641, %v643
        %v667 = vunpack.c.l.s4 1983009808
        %v668 = vunpack.c.0.s8 %v667
        %v669 = vlaneseq
        %v670 = vshrl.u32 %v669, 7
        %v671 = vsub.s32 %v668, %v670
        %v672 = vrot.slane %v664, %v671
        %v674 = vunpack.c.l.s4 1983009808
        %v675 = vunpack.c.0.s8 %v674
        %v676 = vlaneseq
        %v677 = vshrl.u32 %v676, 7
        %v678 = vsub.s32 %v675, %v677
        %v679 = vrot.slane %v665, %v678
        %v680 = vcombine.low %v644, %v646
        %v681 = vcombine.high %v644, %v646
        %v683 = vunpack.c.l.s4 1983009808
        %v684 = vunpack.c.0.s8 %v683
        %v685 = vlaneseq
        %v686 = vshrl.u32 %v685, 7
        %v687 = vsub.s32 %v684, %v686
        %v688 = vrot.slane %v680, %v687
        %v690 = vunpack.c.l.s4 1983009808
        %v691 = vunpack.c.0.s8 %v690
        %v692 = vlaneseq
        %v693 = vshrl.u32 %v692, 7
        %v694 = vsub.s32 %v691, %v693
        %v695 = vrot.slane %v681, %v694
        %v696 = vcombine.low %v645, %v647
        %v697 = vcombine.high %v645, %v647
        %v699 = vunpack.c.l.s4 1983009808
        %v700 = vunpack.c.0.s8 %v699
        %v701 = vlaneseq
        %v702 = vshrl.u32 %v701, 7
        %v703 = vsub.s32 %v700, %v702
        %v704 = vrot.slane %v696, %v703
        %v706 = vunpack.c.l.s4 1983009808
        %v707 = vunpack.c.0.s8 %v706
        %v708 = vlaneseq
        %v709 = vshrl.u32 %v708, 7
        %v710 = vsub.s32 %v707, %v709
        %v711 = vrot.slane %v697, %v710
        %v712 = vcombine.low %v656, %v672
        %v713 = vcombine.high %v656, %v672
        %v715 = vunpack.c.l.s4 1934713408
        %v716 = vunpack.c.0.s8 %v715
        %v717 = vlaneseq
        %v718 = vshrl.u32 %v717, 7
        %v719 = vsub.s32 %v716, %v718
        %v720 = vrot.slane %v712, %v719
        %v722 = vunpack.c.l.s4 1934713408
        %v723 = vunpack.c.0.s8 %v722
        %v724 = vlaneseq
        %v725 = vshrl.u32 %v724, 7
        %v726 = vsub.s32 %v723, %v725
        %v727 = vrot.slane %v713, %v726
        %v728 = vcombine.low %v663, %v679
        %v729 = vcombine.high %v663, %v679
        %v731 = vunpack.c.l.s4 1934713408
        %v732 = vunpack.c.0.s8 %v731
        %v733 = vlaneseq
        %v734 = vshrl.u32 %v733, 7
        %v735 = vsub.s32 %v732, %v734
        %v736 = vrot.slane %v728, %v735
        %v738 = vunpack.c.l.s4 1934713408
        %v739 = vunpack.c.0.s8 %v738
        %v740 = vlaneseq
        %v741 = vshrl.u32 %v740, 7
        %v742 = vsub.s32 %v739, %v741
        %v743 = vrot.slane %v729, %v742
        %v744 = vcombine.low %v688, %v704
        %v745 = vcombine.high %v688, %v704
        %v747 = vunpack.c.l.s4 1934713408
        %v748 = vunpack.c.0.s8 %v747
        %v749 = vlaneseq
        %v750 = vshrl.u32 %v749, 7
        %v751 = vsub.s32 %v748, %v750
        %v752 = vrot.slane %v744, %v751
        %v754 = vunpack.c.l.s4 1934713408
        %v755 = vunpack.c.0.s8 %v754
        %v756 = vlaneseq
        %v757 = vshrl.u32 %v756, 7
        %v758 = vsub.s32 %v755, %v757
        %v759 = vrot.slane %v745, %v758
        %v760 = vcombine.low %v695, %v711
        %v761 = vcombine.high %v695, %v711
        %v763 = vunpack.c.l.s4 1934713408
        %v764 = vunpack.c.0.s8 %v763
        %v765 = vlaneseq
        %v766 = vshrl.u32 %v765, 7
        %v767 = vsub.s32 %v764, %v766
        %v768 = vrot.slane %v760, %v767
        %v770 = vunpack.c.l.s4 1934713408
        %v771 = vunpack.c.0.s8 %v770
        %v772 = vlaneseq
        %v773 = vshrl.u32 %v772, 7
        %v774 = vsub.s32 %v771, %v773
        %v775 = vrot.slane %v761, %v774
        %v776 = vcombine.low %v720, %v752
        %v777 = vcombine.high %v720, %v752
        %v778 = vcombine.low %v727, %v759
        %v779 = vcombine.high %v727, %v759
        %v780 = vcombine.low %v736, %v768
        %v781 = vcombine.high %v736, %v768
        %v782 = vcombine.low %v743, %v775
        %v783 = vcombine.high %v743, %v775
        %785 = vrot.lane.b32.xlu0 %v418, 112
        %v786 = vpop.permute.xlu0 %785
        %788 = vrot.lane.b32.xlu0 %v418, 96
        %v789 = vpop.permute.xlu0 %788
        %791 = vrot.lane.b32.xlu0 %v418, 80
        %v792 = vpop.permute.xlu0 %791
        %794 = vrot.lane.b32.xlu0 %v418, 64
        %v795 = vpop.permute.xlu0 %794
        %797 = vrot.lane.b32.xlu0 %v418, 48
        %v798 = vpop.permute.xlu0 %797
        %800 = vrot.lane.b32.xlu0 %v418, 32
        %v801 = vpop.permute.xlu0 %800
        %803 = vrot.lane.b32.xlu0 %v418, 16
        %v804 = vpop.permute.xlu0 %803
        %v806 = vcombine.low %v418, %v789
        %v807 = vcombine.high %v418, %v789
        %v809 = vunpack.c.l.s4 1983009808
        %v810 = vunpack.c.0.s8 %v809
        %v811 = vlaneseq
        %v812 = vshrl.u32 %v811, 7
        %v813 = vsub.s32 %v810, %v812
        %v814 = vrot.slane %v806, %v813
        %v816 = vunpack.c.l.s4 1983009808
        %v817 = vunpack.c.0.s8 %v816
        %v818 = vlaneseq
        %v819 = vshrl.u32 %v818, 7
        %v820 = vsub.s32 %v817, %v819
        %v821 = vrot.slane %v807, %v820
        %v822 = vcombine.low %v786, %v792
        %v823 = vcombine.high %v786, %v792
        %v825 = vunpack.c.l.s4 1983009808
        %v826 = vunpack.c.0.s8 %v825
        %v827 = vlaneseq
        %v828 = vshrl.u32 %v827, 7
        %v829 = vsub.s32 %v826, %v828
        %v830 = vrot.slane %v822, %v829
        %v832 = vunpack.c.l.s4 1983009808
        %v833 = vunpack.c.0.s8 %v832
        %v834 = vlaneseq
        %v835 = vshrl.u32 %v834, 7
        %v836 = vsub.s32 %v833, %v835
        %v837 = vrot.slane %v823, %v836
        %v838 = vcombine.low %v795, %v801
        %v839 = vcombine.high %v795, %v801
        %v841 = vunpack.c.l.s4 1983009808
        %v842 = vunpack.c.0.s8 %v841
        %v843 = vlaneseq
        %v844 = vshrl.u32 %v843, 7
        %v845 = vsub.s32 %v842, %v844
        %v846 = vrot.slane %v838, %v845
        %v848 = vunpack.c.l.s4 1983009808
        %v849 = vunpack.c.0.s8 %v848
        %v850 = vlaneseq
        %v851 = vshrl.u32 %v850, 7
        %v852 = vsub.s32 %v849, %v851
        %v853 = vrot.slane %v839, %v852
        %v854 = vcombine.low %v798, %v804
        %v855 = vcombine.high %v798, %v804
        %v857 = vunpack.c.l.s4 1983009808
        %v858 = vunpack.c.0.s8 %v857
        %v859 = vlaneseq
        %v860 = vshrl.u32 %v859, 7
        %v861 = vsub.s32 %v858, %v860
        %v862 = vrot.slane %v854, %v861
        %v864 = vunpack.c.l.s4 1983009808
        %v865 = vunpack.c.0.s8 %v864
        %v866 = vlaneseq
        %v867 = vshrl.u32 %v866, 7
        %v868 = vsub.s32 %v865, %v867
        %v869 = vrot.slane %v855, %v868
        %v870 = vcombine.low %v814, %v830
        %v871 = vcombine.high %v814, %v830
        %v873 = vunpack.c.l.s4 1934713408
        %v874 = vunpack.c.0.s8 %v873
        %v875 = vlaneseq
        %v876 = vshrl.u32 %v875, 7
        %v877 = vsub.s32 %v874, %v876
        %v878 = vrot.slane %v870, %v877
        %v880 = vunpack.c.l.s4 1934713408
        %v881 = vunpack.c.0.s8 %v880
        %v882 = vlaneseq
        %v883 = vshrl.u32 %v882, 7
        %v884 = vsub.s32 %v881, %v883
        %v885 = vrot.slane %v871, %v884
        %v886 = vcombine.low %v821, %v837
        %v887 = vcombine.high %v821, %v837
        %v889 = vunpack.c.l.s4 1934713408
        %v890 = vunpack.c.0.s8 %v889
        %v891 = vlaneseq
        %v892 = vshrl.u32 %v891, 7
        %v893 = vsub.s32 %v890, %v892
        %v894 = vrot.slane %v886, %v893
        %v896 = vunpack.c.l.s4 1934713408
        %v897 = vunpack.c.0.s8 %v896
        %v898 = vlaneseq
        %v899 = vshrl.u32 %v898, 7
        %v900 = vsub.s32 %v897, %v899
        %v901 = vrot.slane %v887, %v900
        %v902 = vcombine.low %v846, %v862
        %v903 = vcombine.high %v846, %v862
        %v905 = vunpack.c.l.s4 1934713408
        %v906 = vunpack.c.0.s8 %v905
        %v907 = vlaneseq
        %v908 = vshrl.u32 %v907, 7
        %v909 = vsub.s32 %v906, %v908
        %v910 = vrot.slane %v902, %v909
        %v912 = vunpack.c.l.s4 1934713408
        %v913 = vunpack.c.0.s8 %v912
        %v914 = vlaneseq
        %v915 = vshrl.u32 %v914, 7
        %v916 = vsub.s32 %v913, %v915
        %v917 = vrot.slane %v903, %v916
        %v918 = vcombine.low %v853, %v869
        %v919 = vcombine.high %v853, %v869
        %v921 = vunpack.c.l.s4 1934713408
        %v922 = vunpack.c.0.s8 %v921
        %v923 = vlaneseq
        %v924 = vshrl.u32 %v923, 7
        %v925 = vsub.s32 %v922, %v924
        %v926 = vrot.slane %v918, %v925
        %v928 = vunpack.c.l.s4 1934713408
        %v929 = vunpack.c.0.s8 %v928
        %v930 = vlaneseq
        %v931 = vshrl.u32 %v930, 7
        %v932 = vsub.s32 %v929, %v931
        %v933 = vrot.slane %v919, %v932
        %v934 = vcombine.low %v878, %v910
        %v935 = vcombine.high %v878, %v910
        %v936 = vcombine.low %v885, %v917
        %v937 = vcombine.high %v885, %v917
        %v938 = vcombine.low %v894, %v926
        %v939 = vcombine.high %v894, %v926
        %v940 = vcombine.low %v901, %v933
        %v941 = vcombine.high %v901, %v933
        %v942 = vcombine.low %v934, %v936
        %v943 = vcombine.high %v934, %v936
        %v945 = vunpack.c.l.s4 1983009808
        %v946 = vunpack.c.0.s8 %v945
        %v947 = vlaneseq
        %v948 = vshrl.u32 %v947, 7
        %v949 = vsub.s32 %v946, %v948
        %v950 = vrot.slane %v942, %v949
        %v952 = vunpack.c.l.s4 1983009808
        %v953 = vunpack.c.0.s8 %v952
        %v954 = vlaneseq
        %v955 = vshrl.u32 %v954, 7
        %v956 = vsub.s32 %v953, %v955
        %v957 = vrot.slane %v943, %v956
        %v958 = vcombine.low %v935, %v937
        %v959 = vcombine.high %v935, %v937
        %v961 = vunpack.c.l.s4 1983009808
        %v962 = vunpack.c.0.s8 %v961
        %v963 = vlaneseq
        %v964 = vshrl.u32 %v963, 7
        %v965 = vsub.s32 %v962, %v964
        %v966 = vrot.slane %v958, %v965
        %v968 = vunpack.c.l.s4 1983009808
        %v969 = vunpack.c.0.s8 %v968
        %v970 = vlaneseq
        %v971 = vshrl.u32 %v970, 7
        %v972 = vsub.s32 %v969, %v971
        %v973 = vrot.slane %v959, %v972
        %v974 = vcombine.low %v938, %v940
        %v975 = vcombine.high %v938, %v940
        %v977 = vunpack.c.l.s4 1983009808
        %v978 = vunpack.c.0.s8 %v977
        %v979 = vlaneseq
        %v980 = vshrl.u32 %v979, 7
        %v981 = vsub.s32 %v978, %v980
        %v982 = vrot.slane %v974, %v981
        %v984 = vunpack.c.l.s4 1983009808
        %v985 = vunpack.c.0.s8 %v984
        %v986 = vlaneseq
        %v987 = vshrl.u32 %v986, 7
        %v988 = vsub.s32 %v985, %v987
        %v989 = vrot.slane %v975, %v988
        %v990 = vcombine.low %v939, %v941
        %v991 = vcombine.high %v939, %v941
        %v993 = vunpack.c.l.s4 1983009808
        %v994 = vunpack.c.0.s8 %v993
        %v995 = vlaneseq
        %v996 = vshrl.u32 %v995, 7
        %v997 = vsub.s32 %v994, %v996
        %v998 = vrot.slane %v990, %v997
        %v1000 = vunpack.c.l.s4 1983009808
        %v1001 = vunpack.c.0.s8 %v1000
        %v1002 = vlaneseq
        %v1003 = vshrl.u32 %v1002, 7
        %v1004 = vsub.s32 %v1001, %v1003
        %v1005 = vrot.slane %v991, %v1004
        %v1006 = vcombine.low %v950, %v966
        %v1007 = vcombine.high %v950, %v966
        %v1009 = vunpack.c.l.s4 1934713408
        %v1010 = vunpack.c.0.s8 %v1009
        %v1011 = vlaneseq
        %v1012 = vshrl.u32 %v1011, 7
        %v1013 = vsub.s32 %v1010, %v1012
        %v1014 = vrot.slane %v1006, %v1013
        %v1016 = vunpack.c.l.s4 1934713408
        %v1017 = vunpack.c.0.s8 %v1016
        %v1018 = vlaneseq
        %v1019 = vshrl.u32 %v1018, 7
        %v1020 = vsub.s32 %v1017, %v1019
        %v1021 = vrot.slane %v1007, %v1020
        %v1022 = vcombine.low %v957, %v973
        %v1023 = vcombine.high %v957, %v973
        %v1025 = vunpack.c.l.s4 1934713408
        %v1026 = vunpack.c.0.s8 %v1025
        %v1027 = vlaneseq
        %v1028 = vshrl.u32 %v1027, 7
        %v1029 = vsub.s32 %v1026, %v1028
        %v1030 = vrot.slane %v1022, %v1029
        %v1032 = vunpack.c.l.s4 1934713408
        %v1033 = vunpack.c.0.s8 %v1032
        %v1034 = vlaneseq
        %v1035 = vshrl.u32 %v1034, 7
        %v1036 = vsub.s32 %v1033, %v1035
        %v1037 = vrot.slane %v1023, %v1036
        %v1038 = vcombine.low %v982, %v998
        %v1039 = vcombine.high %v982, %v998
        %v1041 = vunpack.c.l.s4 1934713408
        %v1042 = vunpack.c.0.s8 %v1041
        %v1043 = vlaneseq
        %v1044 = vshrl.u32 %v1043, 7
        %v1045 = vsub.s32 %v1042, %v1044
        %v1046 = vrot.slane %v1038, %v1045
        %v1048 = vunpack.c.l.s4 1934713408
        %v1049 = vunpack.c.0.s8 %v1048
        %v1050 = vlaneseq
        %v1051 = vshrl.u32 %v1050, 7
        %v1052 = vsub.s32 %v1049, %v1051
        %v1053 = vrot.slane %v1039, %v1052
        %v1054 = vcombine.low %v989, %v1005
        %v1055 = vcombine.high %v989, %v1005
        %v1057 = vunpack.c.l.s4 1934713408
        %v1058 = vunpack.c.0.s8 %v1057
        %v1059 = vlaneseq
        %v1060 = vshrl.u32 %v1059, 7
        %v1061 = vsub.s32 %v1058, %v1060
        %v1062 = vrot.slane %v1054, %v1061
        %v1064 = vunpack.c.l.s4 1934713408
        %v1065 = vunpack.c.0.s8 %v1064
        %v1066 = vlaneseq
        %v1067 = vshrl.u32 %v1066, 7
        %v1068 = vsub.s32 %v1065, %v1067
        %v1069 = vrot.slane %v1055, %v1068
        %v1070 = vcombine.low %v1014, %v1046
        %v1071 = vcombine.high %v1014, %v1046
        %v1072 = vcombine.low %v1021, %v1053
        %v1073 = vcombine.high %v1021, %v1053
        %v1074 = vcombine.low %v1030, %v1062
        %v1075 = vcombine.high %v1030, %v1062
        %v1076 = vcombine.low %v1037, %v1069
        %v1077 = vcombine.high %v1037, %v1069
        %1079 = vrot.lane.b32.xlu0 %v487, 112
        %v1080 = vpop.permute.xlu0 %1079
        %1082 = vrot.lane.b32.xlu0 %v487, 96
        %v1083 = vpop.permute.xlu0 %1082
        %1085 = vrot.lane.b32.xlu0 %v487, 80
        %v1086 = vpop.permute.xlu0 %1085
        %1088 = vrot.lane.b32.xlu0 %v487, 64
        %v1089 = vpop.permute.xlu0 %1088
        %1091 = vrot.lane.b32.xlu0 %v487, 48
        %v1092 = vpop.permute.xlu0 %1091
        %1094 = vrot.lane.b32.xlu0 %v487, 32
        %v1095 = vpop.permute.xlu0 %1094
        %1097 = vrot.lane.b32.xlu0 %v487, 16
        %v1098 = vpop.permute.xlu0 %1097
        %v1100 = vcombine.low %v487, %v1083
        %v1101 = vcombine.high %v487, %v1083
        %v1103 = vunpack.c.l.s4 1983009808
        %v1104 = vunpack.c.0.s8 %v1103
        %v1105 = vlaneseq
        %v1106 = vshrl.u32 %v1105, 7
        %v1107 = vsub.s32 %v1104, %v1106
        %v1108 = vrot.slane %v1100, %v1107
        %v1110 = vunpack.c.l.s4 1983009808
        %v1111 = vunpack.c.0.s8 %v1110
        %v1112 = vlaneseq
        %v1113 = vshrl.u32 %v1112, 7
        %v1114 = vsub.s32 %v1111, %v1113
        %v1115 = vrot.slane %v1101, %v1114
        %v1116 = vcombine.low %v1080, %v1086
        %v1117 = vcombine.high %v1080, %v1086
        %v1119 = vunpack.c.l.s4 1983009808
        %v1120 = vunpack.c.0.s8 %v1119
        %v1121 = vlaneseq
        %v1122 = vshrl.u32 %v1121, 7
        %v1123 = vsub.s32 %v1120, %v1122
        %v1124 = vrot.slane %v1116, %v1123
        %v1126 = vunpack.c.l.s4 1983009808
        %v1127 = vunpack.c.0.s8 %v1126
        %v1128 = vlaneseq
        %v1129 = vshrl.u32 %v1128, 7
        %v1130 = vsub.s32 %v1127, %v1129
        %v1131 = vrot.slane %v1117, %v1130
        %v1132 = vcombine.low %v1089, %v1095
        %v1133 = vcombine.high %v1089, %v1095
        %v1135 = vunpack.c.l.s4 1983009808
        %v1136 = vunpack.c.0.s8 %v1135
        %v1137 = vlaneseq
        %v1138 = vshrl.u32 %v1137, 7
        %v1139 = vsub.s32 %v1136, %v1138
        %v1140 = vrot.slane %v1132, %v1139
        %v1142 = vunpack.c.l.s4 1983009808
        %v1143 = vunpack.c.0.s8 %v1142
        %v1144 = vlaneseq
        %v1145 = vshrl.u32 %v1144, 7
        %v1146 = vsub.s32 %v1143, %v1145
        %v1147 = vrot.slane %v1133, %v1146
        %v1148 = vcombine.low %v1092, %v1098
        %v1149 = vcombine.high %v1092, %v1098
        %v1151 = vunpack.c.l.s4 1983009808
        %v1152 = vunpack.c.0.s8 %v1151
        %v1153 = vlaneseq
        %v1154 = vshrl.u32 %v1153, 7
        %v1155 = vsub.s32 %v1152, %v1154
        %v1156 = vrot.slane %v1148, %v1155
        %v1158 = vunpack.c.l.s4 1983009808
        %v1159 = vunpack.c.0.s8 %v1158
        %v1160 = vlaneseq
        %v1161 = vshrl.u32 %v1160, 7
        %v1162 = vsub.s32 %v1159, %v1161
        %v1163 = vrot.slane %v1149, %v1162
        %v1164 = vcombine.low %v1108, %v1124
        %v1165 = vcombine.high %v1108, %v1124
        %v1167 = vunpack.c.l.s4 1934713408
        %v1168 = vunpack.c.0.s8 %v1167
        %v1169 = vlaneseq
        %v1170 = vshrl.u32 %v1169, 7
        %v1171 = vsub.s32 %v1168, %v1170
        %v1172 = vrot.slane %v1164, %v1171
        %v1174 = vunpack.c.l.s4 1934713408
        %v1175 = vunpack.c.0.s8 %v1174
        %v1176 = vlaneseq
        %v1177 = vshrl.u32 %v1176, 7
        %v1178 = vsub.s32 %v1175, %v1177
        %v1179 = vrot.slane %v1165, %v1178
        %v1180 = vcombine.low %v1115, %v1131
        %v1181 = vcombine.high %v1115, %v1131
        %v1183 = vunpack.c.l.s4 1934713408
        %v1184 = vunpack.c.0.s8 %v1183
        %v1185 = vlaneseq
        %v1186 = vshrl.u32 %v1185, 7
        %v1187 = vsub.s32 %v1184, %v1186
        %v1188 = vrot.slane %v1180, %v1187
        %v1190 = vunpack.c.l.s4 1934713408
        %v1191 = vunpack.c.0.s8 %v1190
        %v1192 = vlaneseq
        %v1193 = vshrl.u32 %v1192, 7
        %v1194 = vsub.s32 %v1191, %v1193
        %v1195 = vrot.slane %v1181, %v1194
        %v1196 = vcombine.low %v1140, %v1156
        %v1197 = vcombine.high %v1140, %v1156
        %v1199 = vunpack.c.l.s4 1934713408
        %v1200 = vunpack.c.0.s8 %v1199
        %v1201 = vlaneseq
        %v1202 = vshrl.u32 %v1201, 7
        %v1203 = vsub.s32 %v1200, %v1202
        %v1204 = vrot.slane %v1196, %v1203
        %v1206 = vunpack.c.l.s4 1934713408
        %v1207 = vunpack.c.0.s8 %v1206
        %v1208 = vlaneseq
        %v1209 = vshrl.u32 %v1208, 7
        %v1210 = vsub.s32 %v1207, %v1209
        %v1211 = vrot.slane %v1197, %v1210
        %v1212 = vcombine.low %v1147, %v1163
        %v1213 = vcombine.high %v1147, %v1163
        %v1215 = vunpack.c.l.s4 1934713408
        %v1216 = vunpack.c.0.s8 %v1215
        %v1217 = vlaneseq
        %v1218 = vshrl.u32 %v1217, 7
        %v1219 = vsub.s32 %v1216, %v1218
        %v1220 = vrot.slane %v1212, %v1219
        %v1222 = vunpack.c.l.s4 1934713408
        %v1223 = vunpack.c.0.s8 %v1222
        %v1224 = vlaneseq
        %v1225 = vshrl.u32 %v1224, 7
        %v1226 = vsub.s32 %v1223, %v1225
        %v1227 = vrot.slane %v1213, %v1226
        %v1228 = vcombine.low %v1172, %v1204
        %v1229 = vcombine.high %v1172, %v1204
        %v1230 = vcombine.low %v1179, %v1211
        %v1231 = vcombine.high %v1179, %v1211
        %v1232 = vcombine.low %v1188, %v1220
        %v1233 = vcombine.high %v1188, %v1220
        %v1234 = vcombine.low %v1195, %v1227
        %v1235 = vcombine.high %v1195, %v1227
        %v1236 = vcombine.low %v1228, %v1230
        %v1237 = vcombine.high %v1228, %v1230
        %v1239 = vunpack.c.l.s4 1983009808
        %v1240 = vunpack.c.0.s8 %v1239
        %v1241 = vlaneseq
        %v1242 = vshrl.u32 %v1241, 7
        %v1243 = vsub.s32 %v1240, %v1242
        %v1244 = vrot.slane %v1236, %v1243
        %v1246 = vunpack.c.l.s4 1983009808
        %v1247 = vunpack.c.0.s8 %v1246
        %v1248 = vlaneseq
        %v1249 = vshrl.u32 %v1248, 7
        %v1250 = vsub.s32 %v1247, %v1249
        %v1251 = vrot.slane %v1237, %v1250
        %v1252 = vcombine.low %v1229, %v1231
        %v1253 = vcombine.high %v1229, %v1231
        %v1255 = vunpack.c.l.s4 1983009808
        %v1256 = vunpack.c.0.s8 %v1255
        %v1257 = vlaneseq
        %v1258 = vshrl.u32 %v1257, 7
        %v1259 = vsub.s32 %v1256, %v1258
        %v1260 = vrot.slane %v1252, %v1259
        %v1262 = vunpack.c.l.s4 1983009808
        %v1263 = vunpack.c.0.s8 %v1262
        %v1264 = vlaneseq
        %v1265 = vshrl.u32 %v1264, 7
        %v1266 = vsub.s32 %v1263, %v1265
        %v1267 = vrot.slane %v1253, %v1266
        %v1268 = vcombine.low %v1232, %v1234
        %v1269 = vcombine.high %v1232, %v1234
        %v1271 = vunpack.c.l.s4 1983009808
        %v1272 = vunpack.c.0.s8 %v1271
        %v1273 = vlaneseq
        %v1274 = vshrl.u32 %v1273, 7
        %v1275 = vsub.s32 %v1272, %v1274
        %v1276 = vrot.slane %v1268, %v1275
        %v1278 = vunpack.c.l.s4 1983009808
        %v1279 = vunpack.c.0.s8 %v1278
        %v1280 = vlaneseq
        %v1281 = vshrl.u32 %v1280, 7
        %v1282 = vsub.s32 %v1279, %v1281
        %v1283 = vrot.slane %v1269, %v1282
        %v1284 = vcombine.low %v1233, %v1235
        %v1285 = vcombine.high %v1233, %v1235
        %v1287 = vunpack.c.l.s4 1983009808
        %v1288 = vunpack.c.0.s8 %v1287
        %v1289 = vlaneseq
        %v1290 = vshrl.u32 %v1289, 7
        %v1291 = vsub.s32 %v1288, %v1290
        %v1292 = vrot.slane %v1284, %v1291
        %v1294 = vunpack.c.l.s4 1983009808
        %v1295 = vunpack.c.0.s8 %v1294
        %v1296 = vlaneseq
        %v1297 = vshrl.u32 %v1296, 7
        %v1298 = vsub.s32 %v1295, %v1297
        %v1299 = vrot.slane %v1285, %v1298
        %v1300 = vcombine.low %v1244, %v1260
        %v1301 = vcombine.high %v1244, %v1260
        %v1303 = vunpack.c.l.s4 1934713408
        %v1304 = vunpack.c.0.s8 %v1303
        %v1305 = vlaneseq
        %v1306 = vshrl.u32 %v1305, 7
        %v1307 = vsub.s32 %v1304, %v1306
        %v1308 = vrot.slane %v1300, %v1307
        %v1310 = vunpack.c.l.s4 1934713408
        %v1311 = vunpack.c.0.s8 %v1310
        %v1312 = vlaneseq
        %v1313 = vshrl.u32 %v1312, 7
        %v1314 = vsub.s32 %v1311, %v1313
        %v1315 = vrot.slane %v1301, %v1314
        %v1316 = vcombine.low %v1251, %v1267
        %v1317 = vcombine.high %v1251, %v1267
        %v1319 = vunpack.c.l.s4 1934713408
        %v1320 = vunpack.c.0.s8 %v1319
        %v1321 = vlaneseq
        %v1322 = vshrl.u32 %v1321, 7
        %v1323 = vsub.s32 %v1320, %v1322
        %v1324 = vrot.slane %v1316, %v1323
        %v1326 = vunpack.c.l.s4 1934713408
        %v1327 = vunpack.c.0.s8 %v1326
        %v1328 = vlaneseq
        %v1329 = vshrl.u32 %v1328, 7
        %v1330 = vsub.s32 %v1327, %v1329
        %v1331 = vrot.slane %v1317, %v1330
        %v1332 = vcombine.low %v1276, %v1292
        %v1333 = vcombine.high %v1276, %v1292
        %v1335 = vunpack.c.l.s4 1934713408
        %v1336 = vunpack.c.0.s8 %v1335
        %v1337 = vlaneseq
        %v1338 = vshrl.u32 %v1337, 7
        %v1339 = vsub.s32 %v1336, %v1338
        %v1340 = vrot.slane %v1332, %v1339
        %v1342 = vunpack.c.l.s4 1934713408
        %v1343 = vunpack.c.0.s8 %v1342
        %v1344 = vlaneseq
        %v1345 = vshrl.u32 %v1344, 7
        %v1346 = vsub.s32 %v1343, %v1345
        %v1347 = vrot.slane %v1333, %v1346
        %v1348 = vcombine.low %v1283, %v1299
        %v1349 = vcombine.high %v1283, %v1299
        %v1351 = vunpack.c.l.s4 1934713408
        %v1352 = vunpack.c.0.s8 %v1351
        %v1353 = vlaneseq
        %v1354 = vshrl.u32 %v1353, 7
        %v1355 = vsub.s32 %v1352, %v1354
        %v1356 = vrot.slane %v1348, %v1355
        %v1358 = vunpack.c.l.s4 1934713408
        %v1359 = vunpack.c.0.s8 %v1358
        %v1360 = vlaneseq
        %v1361 = vshrl.u32 %v1360, 7
        %v1362 = vsub.s32 %v1359, %v1361
        %v1363 = vrot.slane %v1349, %v1362
        %v1364 = vcombine.low %v1308, %v1340
        %v1365 = vcombine.high %v1308, %v1340
        %v1366 = vcombine.low %v1315, %v1347
        %v1367 = vcombine.high %v1315, %v1347
        %v1368 = vcombine.low %v1324, %v1356
        %v1369 = vcombine.high %v1324, %v1356
        %v1370 = vcombine.low %v1331, %v1363
        %v1371 = vcombine.high %v1331, %v1363
        %vm1372 = vcmask 130048
        %v1374 = vsel %vm1372, %v776, 0
        %v1377 = vsel %vm1372, %v1070, 0
        %1379 = vmatprep.subr.mxu0 0.0
        %1380 = vmatpush1.xpose.msra.mxu0 %v1377
        %1381 = vmatprep.subr.mxu0 0.0
        %1382 = vmatpush1.xpose.msra.mxu0 0.0
        %1383 = vmatprep.subr.mxu0 0.0
        %1384 = vmatpush1.xpose.msra.mxu0 0.0
        %1385 = vmatprep.subr.mxu0 0.0
        %1386 = vmatpush1.xpose.msra.mxu0 0.0
        %1387 = vmatprep.subr.mxu0 0.0
        %1388 = vmatpush1.xpose.msra.mxu0 0.0
        %1389 = vmatprep.subr.mxu0 0.0
        %1390 = vmatpush1.xpose.msra.mxu0 0.0
        %1391 = vmatprep.subr.mxu0 0.0
        %1392 = vmatpush1.xpose.msra.mxu0 0.0
        %1393 = vmatprep.subr.mxu0 0.0
        %1394 = vmatpush1.xpose.msra.mxu0 0.0
        %1395 = vmatprep.subr.mxu0 0.0
        %1396 = vmatpush1.xpose.msra.mxu0 0.0
        %1397 = vmatprep.subr.mxu0 0.0
        %1398 = vmatpush1.xpose.msra.mxu0 0.0
        %1399 = vmatprep.subr.mxu0 0.0
        %1400 = vmatpush1.xpose.msra.mxu0 0.0
        %1401 = vmatprep.subr.mxu0 0.0
        %1402 = vmatpush1.xpose.msra.mxu0 0.0
        %1403 = vmatprep.subr.mxu0 0.0
        %1404 = vmatpush1.xpose.msra.mxu0 0.0
        %1405 = vmatprep.subr.mxu0 0.0
        %1406 = vmatpush1.xpose.msra.mxu0 0.0
        %1407 = vmatprep.subr.mxu0 0.0
        %1408 = vmatpush1.xpose.msra.mxu0 0.0
        %1409 = vmatprep.subr.mxu0 0.0
        %1410 = vmatpush1.xpose.msra.mxu0 0.0
        %1411 = vmatprep.subr.mxu0 0.0
        %1412 = vmatpush1.xpose.msra.mxu0 0.0
        %1413 = vmatprep.subr.mxu0 0.0
        %1414 = vmatpush1.xpose.msra.mxu0 0.0
        %1415 = vmatprep.subr.mxu0 0.0
        %1416 = vmatpush1.xpose.msra.mxu0 0.0
        %1417 = vmatprep.subr.mxu0 0.0
        %1418 = vmatpush1.xpose.msra.mxu0 0.0
        %1419 = vmatprep.subr.mxu0 0.0
        %1420 = vmatpush1.xpose.msra.mxu0 0.0
        %1421 = vmatprep.subr.mxu0 0.0
        %1422 = vmatpush1.xpose.msra.mxu0 0.0
        %1423 = vmatprep.subr.mxu0 0.0
        %1424 = vmatpush1.xpose.msra.mxu0 0.0
        %1425 = vmatprep.subr.mxu0 0.0
        %1426 = vmatpush1.xpose.msra.mxu0 0.0
        %1427 = vmatprep.subr.mxu0 0.0
        %1428 = vmatpush1.xpose.msra.mxu0 0.0
        %1429 = vmatprep.subr.mxu0 0.0
        %1430 = vmatpush1.xpose.msra.mxu0 0.0
        %1431 = vmatprep.subr.mxu0 0.0
        %1432 = vmatpush1.xpose.msra.mxu0 0.0
        %1433 = vmatprep.subr.mxu0 0.0
        %1434 = vmatpush1.xpose.msra.mxu0 0.0
        %1435 = vmatprep.subr.mxu0 0.0
        %1436 = vmatpush1.xpose.msra.mxu0 0.0
        %1437 = vmatprep.subr.mxu0 0.0
        %1438 = vmatpush1.xpose.msra.mxu0 0.0
        %1439 = vmatprep.subr.mxu0 0.0
        %1440 = vmatpush1.xpose.msra.mxu0 0.0
        %1441 = vmatprep.subr.mxu0 0.0
        %1442 = vmatpush1.xpose.msra.mxu0 0.0
        %1443 = vmatprep.mubr.f32.mxu0 0.0
        %1444 = vmatmul.mubr.f32.gmra.mrb[0].mxu0 %v1374
        %v1445 = vpop.f32.mrb[0].mxu0
        %v1446 = vadd.f32 0.0, %v1445
        %v1447 = vpop.f32.mrb[0].mxu0
        %1448 = vdwg.mxu0
        %v1450 = vsel %vm1372, %v777, 0
        %v1453 = vsel %vm1372, %v1071, 0
        %1455 = vmatprep.subr.mxu0 0.0
        %1456 = vmatpush1.xpose.msra.mxu0 %v1453
        %1457 = vmatprep.subr.mxu0 0.0
        %1458 = vmatpush1.xpose.msra.mxu0 0.0
        %1459 = vmatprep.subr.mxu0 0.0
        %1460 = vmatpush1.xpose.msra.mxu0 0.0
        %1461 = vmatprep.subr.mxu0 0.0
        %1462 = vmatpush1.xpose.msra.mxu0 0.0
        %1463 = vmatprep.subr.mxu0 0.0
        %1464 = vmatpush1.xpose.msra.mxu0 0.0
        %1465 = vmatprep.subr.mxu0 0.0
        %1466 = vmatpush1.xpose.msra.mxu0 0.0
        %1467 = vmatprep.subr.mxu0 0.0
        %1468 = vmatpush1.xpose.msra.mxu0 0.0
        %1469 = vmatprep.subr.mxu0 0.0
        %1470 = vmatpush1.xpose.msra.mxu0 0.0
        %1471 = vmatprep.subr.mxu0 0.0
        %1472 = vmatpush1.xpose.msra.mxu0 0.0
        %1473 = vmatprep.subr.mxu0 0.0
        %1474 = vmatpush1.xpose.msra.mxu0 0.0
        %1475 = vmatprep.subr.mxu0 0.0
        %1476 = vmatpush1.xpose.msra.mxu0 0.0
        %1477 = vmatprep.subr.mxu0 0.0
        %1478 = vmatpush1.xpose.msra.mxu0 0.0
        %1479 = vmatprep.subr.mxu0 0.0
        %1480 = vmatpush1.xpose.msra.mxu0 0.0
        %1481 = vmatprep.subr.mxu0 0.0
        %1482 = vmatpush1.xpose.msra.mxu0 0.0
        %1483 = vmatprep.subr.mxu0 0.0
        %1484 = vmatpush1.xpose.msra.mxu0 0.0
        %1485 = vmatprep.subr.mxu0 0.0
        %1486 = vmatpush1.xpose.msra.mxu0 0.0
        %1487 = vmatprep.subr.mxu0 0.0
        %1488 = vmatpush1.xpose.msra.mxu0 0.0
        %1489 = vmatprep.subr.mxu0 0.0
        %1490 = vmatpush1.xpose.msra.mxu0 0.0
        %1491 = vmatprep.subr.mxu0 0.0
        %1492 = vmatpush1.xpose.msra.mxu0 0.0
        %1493 = vmatprep.subr.mxu0 0.0
        %1494 = vmatpush1.xpose.msra.mxu0 0.0
        %1495 = vmatprep.subr.mxu0 0.0
        %1496 = vmatpush1.xpose.msra.mxu0 0.0
        %1497 = vmatprep.subr.mxu0 0.0
        %1498 = vmatpush1.xpose.msra.mxu0 0.0
        %1499 = vmatprep.subr.mxu0 0.0
        %1500 = vmatpush1.xpose.msra.mxu0 0.0
        %1501 = vmatprep.subr.mxu0 0.0
        %1502 = vmatpush1.xpose.msra.mxu0 0.0
        %1503 = vmatprep.subr.mxu0 0.0
        %1504 = vmatpush1.xpose.msra.mxu0 0.0
        %1505 = vmatprep.subr.mxu0 0.0
        %1506 = vmatpush1.xpose.msra.mxu0 0.0
        %1507 = vmatprep.subr.mxu0 0.0
        %1508 = vmatpush1.xpose.msra.mxu0 0.0
        %1509 = vmatprep.subr.mxu0 0.0
        %1510 = vmatpush1.xpose.msra.mxu0 0.0
        %1511 = vmatprep.subr.mxu0 0.0
        %1512 = vmatpush1.xpose.msra.mxu0 0.0
        %1513 = vmatprep.subr.mxu0 0.0
        %1514 = vmatpush1.xpose.msra.mxu0 0.0
        %1515 = vmatprep.subr.mxu0 0.0
        %1516 = vmatpush1.xpose.msra.mxu0 0.0
        %1517 = vmatprep.subr.mxu0 0.0
        %1518 = vmatpush1.xpose.msra.mxu0 0.0
        %1519 = vmatprep.mubr.f32.mxu0 0.0
        %1520 = vmatmul.mubr.f32.gmra.mrb[0].mxu0 %v1450
        %v1521 = vpop.f32.mrb[0].mxu0
        %v1522 = vadd.f32 0.0, %v1521
        %v1523 = vpop.f32.mrb[0].mxu0
        %1524 = vdwg.mxu0
        %v1526 = vsel %vm1372, %v778, 0
        %v1529 = vsel %vm1372, %v1072, 0
        %1531 = vmatprep.subr.mxu0 0.0
        %1532 = vmatpush1.xpose.msra.mxu0 %v1529
        %1533 = vmatprep.subr.mxu0 0.0
        %1534 = vmatpush1.xpose.msra.mxu0 0.0
        %1535 = vmatprep.subr.mxu0 0.0
        %1536 = vmatpush1.xpose.msra.mxu0 0.0
        %1537 = vmatprep.subr.mxu0 0.0
        %1538 = vmatpush1.xpose.msra.mxu0 0.0
        %1539 = vmatprep.subr.mxu0 0.0
        %1540 = vmatpush1.xpose.msra.mxu0 0.0
        %1541 = vmatprep.subr.mxu0 0.0
        %1542 = vmatpush1.xpose.msra.mxu0 0.0
        %1543 = vmatprep.subr.mxu0 0.0
        %1544 = vmatpush1.xpose.msra.mxu0 0.0
        %1545 = vmatprep.subr.mxu0 0.0
        %1546 = vmatpush1.xpose.msra.mxu0 0.0
        %1547 = vmatprep.subr.mxu0 0.0
        %1548 = vmatpush1.xpose.msra.mxu0 0.0
        %1549 = vmatprep.subr.mxu0 0.0
        %1550 = vmatpush1.xpose.msra.mxu0 0.0
        %1551 = vmatprep.subr.mxu0 0.0
        %1552 = vmatpush1.xpose.msra.mxu0 0.0
        %1553 = vmatprep.subr.mxu0 0.0
        %1554 = vmatpush1.xpose.msra.mxu0 0.0
        %1555 = vmatprep.subr.mxu0 0.0
        %1556 = vmatpush1.xpose.msra.mxu0 0.0
        %1557 = vmatprep.subr.mxu0 0.0
        %1558 = vmatpush1.xpose.msra.mxu0 0.0
        %1559 = vmatprep.subr.mxu0 0.0
        %1560 = vmatpush1.xpose.msra.mxu0 0.0
        %1561 = vmatprep.subr.mxu0 0.0
        %1562 = vmatpush1.xpose.msra.mxu0 0.0
        %1563 = vmatprep.subr.mxu0 0.0
        %1564 = vmatpush1.xpose.msra.mxu0 0.0
        %1565 = vmatprep.subr.mxu0 0.0
        %1566 = vmatpush1.xpose.msra.mxu0 0.0
        %1567 = vmatprep.subr.mxu0 0.0
        %1568 = vmatpush1.xpose.msra.mxu0 0.0
        %1569 = vmatprep.subr.mxu0 0.0
        %1570 = vmatpush1.xpose.msra.mxu0 0.0
        %1571 = vmatprep.subr.mxu0 0.0
        %1572 = vmatpush1.xpose.msra.mxu0 0.0
        %1573 = vmatprep.subr.mxu0 0.0
        %1574 = vmatpush1.xpose.msra.mxu0 0.0
        %1575 = vmatprep.subr.mxu0 0.0
        %1576 = vmatpush1.xpose.msra.mxu0 0.0
        %1577 = vmatprep.subr.mxu0 0.0
        %1578 = vmatpush1.xpose.msra.mxu0 0.0
        %1579 = vmatprep.subr.mxu0 0.0
        %1580 = vmatpush1.xpose.msra.mxu0 0.0
        %1581 = vmatprep.subr.mxu0 0.0
        %1582 = vmatpush1.xpose.msra.mxu0 0.0
        %1583 = vmatprep.subr.mxu0 0.0
        %1584 = vmatpush1.xpose.msra.mxu0 0.0
        %1585 = vmatprep.subr.mxu0 0.0
        %1586 = vmatpush1.xpose.msra.mxu0 0.0
        %1587 = vmatprep.subr.mxu0 0.0
        %1588 = vmatpush1.xpose.msra.mxu0 0.0
        %1589 = vmatprep.subr.mxu0 0.0
        %1590 = vmatpush1.xpose.msra.mxu0 0.0
        %1591 = vmatprep.subr.mxu0 0.0
        %1592 = vmatpush1.xpose.msra.mxu0 0.0
        %1593 = vmatprep.subr.mxu0 0.0
        %1594 = vmatpush1.xpose.msra.mxu0 0.0
        %1595 = vmatprep.mubr.f32.mxu0 0.0
        %1596 = vmatmul.mubr.f32.gmra.mrb[0].mxu0 %v1526
        %v1597 = vpop.f32.mrb[0].mxu0
        %v1598 = vadd.f32 0.0, %v1597
        %v1599 = vpop.f32.mrb[0].mxu0
        %1600 = vdwg.mxu0
        %v1602 = vsel %vm1372, %v779, 0
        %v1605 = vsel %vm1372, %v1073, 0
        %1607 = vmatprep.subr.mxu0 0.0
        %1608 = vmatpush1.xpose.msra.mxu0 %v1605
        %1609 = vmatprep.subr.mxu0 0.0
        %1610 = vmatpush1.xpose.msra.mxu0 0.0
        %1611 = vmatprep.subr.mxu0 0.0
        %1612 = vmatpush1.xpose.msra.mxu0 0.0
        %1613 = vmatprep.subr.mxu0 0.0
        %1614 = vmatpush1.xpose.msra.mxu0 0.0
        %1615 = vmatprep.subr.mxu0 0.0
        %1616 = vmatpush1.xpose.msra.mxu0 0.0
        %1617 = vmatprep.subr.mxu0 0.0
        %1618 = vmatpush1.xpose.msra.mxu0 0.0
        %1619 = vmatprep.subr.mxu0 0.0
        %1620 = vmatpush1.xpose.msra.mxu0 0.0
        %1621 = vmatprep.subr.mxu0 0.0
        %1622 = vmatpush1.xpose.msra.mxu0 0.0
        %1623 = vmatprep.subr.mxu0 0.0
        %1624 = vmatpush1.xpose.msra.mxu0 0.0
        %1625 = vmatprep.subr.mxu0 0.0
        %1626 = vmatpush1.xpose.msra.mxu0 0.0
        %1627 = vmatprep.subr.mxu0 0.0
        %1628 = vmatpush1.xpose.msra.mxu0 0.0
        %1629 = vmatprep.subr.mxu0 0.0
        %1630 = vmatpush1.xpose.msra.mxu0 0.0
        %1631 = vmatprep.subr.mxu0 0.0
        %1632 = vmatpush1.xpose.msra.mxu0 0.0
        %1633 = vmatprep.subr.mxu0 0.0
        %1634 = vmatpush1.xpose.msra.mxu0 0.0
        %1635 = vmatprep.subr.mxu0 0.0
        %1636 = vmatpush1.xpose.msra.mxu0 0.0
        %1637 = vmatprep.subr.mxu0 0.0
        %1638 = vmatpush1.xpose.msra.mxu0 0.0
        %1639 = vmatprep.subr.mxu0 0.0
        %1640 = vmatpush1.xpose.msra.mxu0 0.0
        %1641 = vmatprep.subr.mxu0 0.0
        %1642 = vmatpush1.xpose.msra.mxu0 0.0
        %1643 = vmatprep.subr.mxu0 0.0
        %1644 = vmatpush1.xpose.msra.mxu0 0.0
        %1645 = vmatprep.subr.mxu0 0.0
        %1646 = vmatpush1.xpose.msra.mxu0 0.0
        %1647 = vmatprep.subr.mxu0 0.0
        %1648 = vmatpush1.xpose.msra.mxu0 0.0
        %1649 = vmatprep.subr.mxu0 0.0
        %1650 = vmatpush1.xpose.msra.mxu0 0.0
        %1651 = vmatprep.subr.mxu0 0.0
        %1652 = vmatpush1.xpose.msra.mxu0 0.0
        %1653 = vmatprep.subr.mxu0 0.0
        %1654 = vmatpush1.xpose.msra.mxu0 0.0
        %1655 = vmatprep.subr.mxu0 0.0
        %1656 = vmatpush1.xpose.msra.mxu0 0.0
        %1657 = vmatprep.subr.mxu0 0.0
        %1658 = vmatpush1.xpose.msra.mxu0 0.0
        %1659 = vmatprep.subr.mxu0 0.0
        %1660 = vmatpush1.xpose.msra.mxu0 0.0
        %1661 = vmatprep.subr.mxu0 0.0
        %1662 = vmatpush1.xpose.msra.mxu0 0.0
        %1663 = vmatprep.subr.mxu0 0.0
        %1664 = vmatpush1.xpose.msra.mxu0 0.0
        %1665 = vmatprep.subr.mxu0 0.0
        %1666 = vmatpush1.xpose.msra.mxu0 0.0
        %1667 = vmatprep.subr.mxu0 0.0
        %1668 = vmatpush1.xpose.msra.mxu0 0.0
        %1669 = vmatprep.subr.mxu0 0.0
        %1670 = vmatpush1.xpose.msra.mxu0 0.0
        %1671 = vmatprep.mubr.f32.mxu0 0.0
        %1672 = vmatmul.mubr.f32.gmra.mrb[0].mxu0 %v1602
        %v1673 = vpop.f32.mrb[0].mxu0
        %v1674 = vadd.f32 0.0, %v1673
        %v1675 = vpop.f32.mrb[0].mxu0
        %1676 = vdwg.mxu0
        %v1678 = vsel %vm1372, %v780, 0
        %v1681 = vsel %vm1372, %v1074, 0
        %1683 = vmatprep.subr.mxu0 0.0
        %1684 = vmatpush1.xpose.msra.mxu0 %v1681
        %1685 = vmatprep.subr.mxu0 0.0
        %1686 = vmatpush1.xpose.msra.mxu0 0.0
        %1687 = vmatprep.subr.mxu0 0.0
        %1688 = vmatpush1.xpose.msra.mxu0 0.0
        %1689 = vmatprep.subr.mxu0 0.0
        %1690 = vmatpush1.xpose.msra.mxu0 0.0
        %1691 = vmatprep.subr.mxu0 0.0
        %1692 = vmatpush1.xpose.msra.mxu0 0.0
        %1693 = vmatprep.subr.mxu0 0.0
        %1694 = vmatpush1.xpose.msra.mxu0 0.0
        %1695 = vmatprep.subr.mxu0 0.0
        %1696 = vmatpush1.xpose.msra.mxu0 0.0
        %1697 = vmatprep.subr.mxu0 0.0
        %1698 = vmatpush1.xpose.msra.mxu0 0.0
        %1699 = vmatprep.subr.mxu0 0.0
        %1700 = vmatpush1.xpose.msra.mxu0 0.0
        %1701 = vmatprep.subr.mxu0 0.0
        %1702 = vmatpush1.xpose.msra.mxu0 0.0
        %1703 = vmatprep.subr.mxu0 0.0
        %1704 = vmatpush1.xpose.msra.mxu0 0.0
        %1705 = vmatprep.subr.mxu0 0.0
        %1706 = vmatpush1.xpose.msra.mxu0 0.0
        %1707 = vmatprep.subr.mxu0 0.0
        %1708 = vmatpush1.xpose.msra.mxu0 0.0
        %1709 = vmatprep.subr.mxu0 0.0
        %1710 = vmatpush1.xpose.msra.mxu0 0.0
        %1711 = vmatprep.subr.mxu0 0.0
        %1712 = vmatpush1.xpose.msra.mxu0 0.0
        %1713 = vmatprep.subr.mxu0 0.0
        %1714 = vmatpush1.xpose.msra.mxu0 0.0
        %1715 = vmatprep.subr.mxu0 0.0
        %1716 = vmatpush1.xpose.msra.mxu0 0.0
        %1717 = vmatprep.subr.mxu0 0.0
        %1718 = vmatpush1.xpose.msra.mxu0 0.0
        %1719 = vmatprep.subr.mxu0 0.0
        %1720 = vmatpush1.xpose.msra.mxu0 0.0
        %1721 = vmatprep.subr.mxu0 0.0
        %1722 = vmatpush1.xpose.msra.mxu0 0.0
        %1723 = vmatprep.subr.mxu0 0.0
        %1724 = vmatpush1.xpose.msra.mxu0 0.0
        %1725 = vmatprep.subr.mxu0 0.0
        %1726 = vmatpush1.xpose.msra.mxu0 0.0
        %1727 = vmatprep.subr.mxu0 0.0
        %1728 = vmatpush1.xpose.msra.mxu0 0.0
        %1729 = vmatprep.subr.mxu0 0.0
        %1730 = vmatpush1.xpose.msra.mxu0 0.0
        %1731 = vmatprep.subr.mxu0 0.0
        %1732 = vmatpush1.xpose.msra.mxu0 0.0
        %1733 = vmatprep.subr.mxu0 0.0
        %1734 = vmatpush1.xpose.msra.mxu0 0.0
        %1735 = vmatprep.subr.mxu0 0.0
        %1736 = vmatpush1.xpose.msra.mxu0 0.0
        %1737 = vmatprep.subr.mxu0 0.0
        %1738 = vmatpush1.xpose.msra.mxu0 0.0
        %1739 = vmatprep.subr.mxu0 0.0
        %1740 = vmatpush1.xpose.msra.mxu0 0.0
        %1741 = vmatprep.subr.mxu0 0.0
        %1742 = vmatpush1.xpose.msra.mxu0 0.0
        %1743 = vmatprep.subr.mxu0 0.0
        %1744 = vmatpush1.xpose.msra.mxu0 0.0
        %1745 = vmatprep.subr.mxu0 0.0
        %1746 = vmatpush1.xpose.msra.mxu0 0.0
        %1747 = vmatprep.mubr.f32.mxu0 0.0
        %1748 = vmatmul.mubr.f32.gmra.mrb[0].mxu0 %v1678
        %v1749 = vpop.f32.mrb[0].mxu0
        %v1750 = vadd.f32 0.0, %v1749
        %v1751 = vpop.f32.mrb[0].mxu0
        %1752 = vdwg.mxu0
        %v1754 = vsel %vm1372, %v781, 0
        %v1757 = vsel %vm1372, %v1075, 0
        %1759 = vmatprep.subr.mxu0 0.0
        %1760 = vmatpush1.xpose.msra.mxu0 %v1757
        %1761 = vmatprep.subr.mxu0 0.0
        %1762 = vmatpush1.xpose.msra.mxu0 0.0
        %1763 = vmatprep.subr.mxu0 0.0
        %1764 = vmatpush1.xpose.msra.mxu0 0.0
        %1765 = vmatprep.subr.mxu0 0.0
        %1766 = vmatpush1.xpose.msra.mxu0 0.0
        %1767 = vmatprep.subr.mxu0 0.0
        %1768 = vmatpush1.xpose.msra.mxu0 0.0
        %1769 = vmatprep.subr.mxu0 0.0
        %1770 = vmatpush1.xpose.msra.mxu0 0.0
        %1771 = vmatprep.subr.mxu0 0.0
        %1772 = vmatpush1.xpose.msra.mxu0 0.0
        %1773 = vmatprep.subr.mxu0 0.0
        %1774 = vmatpush1.xpose.msra.mxu0 0.0
        %1775 = vmatprep.subr.mxu0 0.0
        %1776 = vmatpush1.xpose.msra.mxu0 0.0
        %1777 = vmatprep.subr.mxu0 0.0
        %1778 = vmatpush1.xpose.msra.mxu0 0.0
        %1779 = vmatprep.subr.mxu0 0.0
        %1780 = vmatpush1.xpose.msra.mxu0 0.0
        %1781 = vmatprep.subr.mxu0 0.0
        %1782 = vmatpush1.xpose.msra.mxu0 0.0
        %1783 = vmatprep.subr.mxu0 0.0
        %1784 = vmatpush1.xpose.msra.mxu0 0.0
        %1785 = vmatprep.subr.mxu0 0.0
        %1786 = vmatpush1.xpose.msra.mxu0 0.0
        %1787 = vmatprep.subr.mxu0 0.0
        %1788 = vmatpush1.xpose.msra.mxu0 0.0
        %1789 = vmatprep.subr.mxu0 0.0
        %1790 = vmatpush1.xpose.msra.mxu0 0.0
        %1791 = vmatprep.subr.mxu0 0.0
        %1792 = vmatpush1.xpose.msra.mxu0 0.0
        %1793 = vmatprep.subr.mxu0 0.0
        %1794 = vmatpush1.xpose.msra.mxu0 0.0
        %1795 = vmatprep.subr.mxu0 0.0
        %1796 = vmatpush1.xpose.msra.mxu0 0.0
        %1797 = vmatprep.subr.mxu0 0.0
        %1798 = vmatpush1.xpose.msra.mxu0 0.0
        %1799 = vmatprep.subr.mxu0 0.0
        %1800 = vmatpush1.xpose.msra.mxu0 0.0
        %1801 = vmatprep.subr.mxu0 0.0
        %1802 = vmatpush1.xpose.msra.mxu0 0.0
        %1803 = vmatprep.subr.mxu0 0.0
        %1804 = vmatpush1.xpose.msra.mxu0 0.0
        %1805 = vmatprep.subr.mxu0 0.0
        %1806 = vmatpush1.xpose.msra.mxu0 0.0
        %1807 = vmatprep.subr.mxu0 0.0
        %1808 = vmatpush1.xpose.msra.mxu0 0.0
        %1809 = vmatprep.subr.mxu0 0.0
        %1810 = vmatpush1.xpose.msra.mxu0 0.0
        %1811 = vmatprep.subr.mxu0 0.0
        %1812 = vmatpush1.xpose.msra.mxu0 0.0
        %1813 = vmatprep.subr.mxu0 0.0
        %1814 = vmatpush1.xpose.msra.mxu0 0.0
        %1815 = vmatprep.subr.mxu0 0.0
        %1816 = vmatpush1.xpose.msra.mxu0 0.0
        %1817 = vmatprep.subr.mxu0 0.0
        %1818 = vmatpush1.xpose.msra.mxu0 0.0
        %1819 = vmatprep.subr.mxu0 0.0
        %1820 = vmatpush1.xpose.msra.mxu0 0.0
        %1821 = vmatprep.subr.mxu0 0.0
        %1822 = vmatpush1.xpose.msra.mxu0 0.0
        %1823 = vmatprep.mubr.f32.mxu0 0.0
        %1824 = vmatmul.mubr.f32.gmra.mrb[0].mxu0 %v1754
        %v1825 = vpop.f32.mrb[0].mxu0
        %v1826 = vadd.f32 0.0, %v1825
        %v1827 = vpop.f32.mrb[0].mxu0
        %1828 = vdwg.mxu0
        %v1830 = vsel %vm1372, %v782, 0
        %v1833 = vsel %vm1372, %v1076, 0
        %1835 = vmatprep.subr.mxu0 0.0
        %1836 = vmatpush1.xpose.msra.mxu0 %v1833
        %1837 = vmatprep.subr.mxu0 0.0
        %1838 = vmatpush1.xpose.msra.mxu0 0.0
        %1839 = vmatprep.subr.mxu0 0.0
        %1840 = vmatpush1.xpose.msra.mxu0 0.0
        %1841 = vmatprep.subr.mxu0 0.0
        %1842 = vmatpush1.xpose.msra.mxu0 0.0
        %1843 = vmatprep.subr.mxu0 0.0
        %1844 = vmatpush1.xpose.msra.mxu0 0.0
        %1845 = vmatprep.subr.mxu0 0.0
        %1846 = vmatpush1.xpose.msra.mxu0 0.0
        %1847 = vmatprep.subr.mxu0 0.0
        %1848 = vmatpush1.xpose.msra.mxu0 0.0
        %1849 = vmatprep.subr.mxu0 0.0
        %1850 = vmatpush1.xpose.msra.mxu0 0.0
        %1851 = vmatprep.subr.mxu0 0.0
        %1852 = vmatpush1.xpose.msra.mxu0 0.0
        %1853 = vmatprep.subr.mxu0 0.0
        %1854 = vmatpush1.xpose.msra.mxu0 0.0
        %1855 = vmatprep.subr.mxu0 0.0
        %1856 = vmatpush1.xpose.msra.mxu0 0.0
        %1857 = vmatprep.subr.mxu0 0.0
        %1858 = vmatpush1.xpose.msra.mxu0 0.0
        %1859 = vmatprep.subr.mxu0 0.0
        %1860 = vmatpush1.xpose.msra.mxu0 0.0
        %1861 = vmatprep.subr.mxu0 0.0
        %1862 = vmatpush1.xpose.msra.mxu0 0.0
        %1863 = vmatprep.subr.mxu0 0.0
        %1864 = vmatpush1.xpose.msra.mxu0 0.0
        %1865 = vmatprep.subr.mxu0 0.0
        %1866 = vmatpush1.xpose.msra.mxu0 0.0
        %1867 = vmatprep.subr.mxu0 0.0
        %1868 = vmatpush1.xpose.msra.mxu0 0.0
        %1869 = vmatprep.subr.mxu0 0.0
        %1870 = vmatpush1.xpose.msra.mxu0 0.0
        %1871 = vmatprep.subr.mxu0 0.0
        %1872 = vmatpush1.xpose.msra.mxu0 0.0
        %1873 = vmatprep.subr.mxu0 0.0
        %1874 = vmatpush1.xpose.msra.mxu0 0.0
        %1875 = vmatprep.subr.mxu0 0.0
        %1876 = vmatpush1.xpose.msra.mxu0 0.0
        %1877 = vmatprep.subr.mxu0 0.0
        %1878 = vmatpush1.xpose.msra.mxu0 0.0
        %1879 = vmatprep.subr.mxu0 0.0
        %1880 = vmatpush1.xpose.msra.mxu0 0.0
        %1881 = vmatprep.subr.mxu0 0.0
        %1882 = vmatpush1.xpose.msra.mxu0 0.0
        %1883 = vmatprep.subr.mxu0 0.0
        %1884 = vmatpush1.xpose.msra.mxu0 0.0
        %1885 = vmatprep.subr.mxu0 0.0
        %1886 = vmatpush1.xpose.msra.mxu0 0.0
        %1887 = vmatprep.subr.mxu0 0.0
        %1888 = vmatpush1.xpose.msra.mxu0 0.0
        %1889 = vmatprep.subr.mxu0 0.0
        %1890 = vmatpush1.xpose.msra.mxu0 0.0
        %1891 = vmatprep.subr.mxu0 0.0
        %1892 = vmatpush1.xpose.msra.mxu0 0.0
        %1893 = vmatprep.subr.mxu0 0.0
        %1894 = vmatpush1.xpose.msra.mxu0 0.0
        %1895 = vmatprep.subr.mxu0 0.0
        %1896 = vmatpush1.xpose.msra.mxu0 0.0
        %1897 = vmatprep.subr.mxu0 0.0
        %1898 = vmatpush1.xpose.msra.mxu0 0.0
        %1899 = vmatprep.mubr.f32.mxu0 0.0
        %1900 = vmatmul.mubr.f32.gmra.mrb[0].mxu0 %v1830
        %v1901 = vpop.f32.mrb[0].mxu0
        %v1902 = vadd.f32 0.0, %v1901
        %v1903 = vpop.f32.mrb[0].mxu0
        %1904 = vdwg.mxu0
        %v1906 = vsel %vm1372, %v783, 0
        %v1909 = vsel %vm1372, %v1077, 0
        %1911 = vmatprep.subr.mxu0 0.0
        %1912 = vmatpush1.xpose.msra.mxu0 %v1909
        %1913 = vmatprep.subr.mxu0 0.0
        %1914 = vmatpush1.xpose.msra.mxu0 0.0
        %1915 = vmatprep.subr.mxu0 0.0
        %1916 = vmatpush1.xpose.msra.mxu0 0.0
        %1917 = vmatprep.subr.mxu0 0.0
        %1918 = vmatpush1.xpose.msra.mxu0 0.0
        %1919 = vmatprep.subr.mxu0 0.0
        %1920 = vmatpush1.xpose.msra.mxu0 0.0
        %1921 = vmatprep.subr.mxu0 0.0
        %1922 = vmatpush1.xpose.msra.mxu0 0.0
        %1923 = vmatprep.subr.mxu0 0.0
        %1924 = vmatpush1.xpose.msra.mxu0 0.0
        %1925 = vmatprep.subr.mxu0 0.0
        %1926 = vmatpush1.xpose.msra.mxu0 0.0
        %1927 = vmatprep.subr.mxu0 0.0
        %1928 = vmatpush1.xpose.msra.mxu0 0.0
        %1929 = vmatprep.subr.mxu0 0.0
        %1930 = vmatpush1.xpose.msra.mxu0 0.0
        %1931 = vmatprep.subr.mxu0 0.0
        %1932 = vmatpush1.xpose.msra.mxu0 0.0
        %1933 = vmatprep.subr.mxu0 0.0
        %1934 = vmatpush1.xpose.msra.mxu0 0.0
        %1935 = vmatprep.subr.mxu0 0.0
        %1936 = vmatpush1.xpose.msra.mxu0 0.0
        %1937 = vmatprep.subr.mxu0 0.0
        %1938 = vmatpush1.xpose.msra.mxu0 0.0
        %1939 = vmatprep.subr.mxu0 0.0
        %1940 = vmatpush1.xpose.msra.mxu0 0.0
        %1941 = vmatprep.subr.mxu0 0.0
        %1942 = vmatpush1.xpose.msra.mxu0 0.0
        %1943 = vmatprep.subr.mxu0 0.0
        %1944 = vmatpush1.xpose.msra.mxu0 0.0
        %1945 = vmatprep.subr.mxu0 0.0
        %1946 = vmatpush1.xpose.msra.mxu0 0.0
        %1947 = vmatprep.subr.mxu0 0.0
        %1948 = vmatpush1.xpose.msra.mxu0 0.0
        %1949 = vmatprep.subr.mxu0 0.0
        %1950 = vmatpush1.xpose.msra.mxu0 0.0
        %1951 = vmatprep.subr.mxu0 0.0
        %1952 = vmatpush1.xpose.msra.mxu0 0.0
        %1953 = vmatprep.subr.mxu0 0.0
        %1954 = vmatpush1.xpose.msra.mxu0 0.0
        %1955 = vmatprep.subr.mxu0 0.0
        %1956 = vmatpush1.xpose.msra.mxu0 0.0
        %1957 = vmatprep.subr.mxu0 0.0
        %1958 = vmatpush1.xpose.msra.mxu0 0.0
        %1959 = vmatprep.subr.mxu0 0.0
        %1960 = vmatpush1.xpose.msra.mxu0 0.0
        %1961 = vmatprep.subr.mxu0 0.0
        %1962 = vmatpush1.xpose.msra.mxu0 0.0
        %1963 = vmatprep.subr.mxu0 0.0
        %1964 = vmatpush1.xpose.msra.mxu0 0.0
        %1965 = vmatprep.subr.mxu0 0.0
        %1966 = vmatpush1.xpose.msra.mxu0 0.0
        %1967 = vmatprep.subr.mxu0 0.0
        %1968 = vmatpush1.xpose.msra.mxu0 0.0
        %1969 = vmatprep.subr.mxu0 0.0
        %1970 = vmatpush1.xpose.msra.mxu0 0.0
        %1971 = vmatprep.subr.mxu0 0.0
        %1972 = vmatpush1.xpose.msra.mxu0 0.0
        %1973 = vmatprep.subr.mxu0 0.0
        %1974 = vmatpush1.xpose.msra.mxu0 0.0
        %1975 = vmatprep.mubr.f32.mxu0 0.0
        %1976 = vmatmul.mubr.f32.gmra.mrb[0].mxu0 %v1906
        %v1977 = vpop.f32.mrb[0].mxu0
        %v1978 = vadd.f32 0.0, %v1977
        %v1979 = vpop.f32.mrb[0].mxu0
        %1980 = vdwg.mxu0
        %vm1981 = vcmask 64512
        %v1982 = vsel %vm1981, %v1446, -inf
        %v1983 = vsel %vm1981, %v1522, -inf
        %v1984 = vsel %vm1981, %v1598, -inf
        %v1985 = vsel %vm1981, %v1674, -inf
        %v1986 = vsel %vm1981, %v1750, -inf
        %v1987 = vmax.f32 %v1982, %v1986
        %v1988 = vsel %vm1981, %v1826, -inf
        %v1989 = vmax.f32 %v1983, %v1988
        %v1990 = vsel %vm1981, %v1902, -inf
        %v1991 = vmax.f32 %v1984, %v1990
        %v1992 = vsel %vm1981, %v1978, -inf
        %v1993 = vmax.f32 %v1985, %v1992
        %v1994 = vmax.f32 %v1987, %v1989
        %v1995 = vmax.f32 %v1991, %v1993
        %v1996 = vmax.f32 %v1994, %v1995
        %v1997 = vsub.f32 %v1446, %v1996
        %v1998 = vsub.f32 %v1522, %v1996
        %v1999 = vsub.f32 %v1598, %v1996
        %v2000 = vsub.f32 %v1674, %v1996
        %v2001 = vsub.f32 %v1750, %v1996
        %v2002 = vsub.f32 %v1826, %v1996
        %v2003 = vsub.f32 %v1902, %v1996
        %v2004 = vsub.f32 %v1978, %v1996
        %v2005 = vmul.f32 %v1997, 1.442695
        %v2006 = vpow.pop %v2005
        %v2007 = vmul.f32 %v1998, 1.442695
        %v2008 = vpow.pop %v2007
        %v2009 = vmul.f32 %v1999, 1.442695
        %v2010 = vpow.pop %v2009
        %v2011 = vmul.f32 %v2000, 1.442695
        %v2012 = vpow.pop %v2011
        %v2013 = vmul.f32 %v2001, 1.442695
        %v2014 = vpow.pop %v2013
        %v2015 = vmul.f32 %v2002, 1.442695
        %v2016 = vpow.pop %v2015
        %v2017 = vmul.f32 %v2003, 1.442695
        %v2018 = vpow.pop %v2017
        %v2019 = vmul.f32 %v2004, 1.442695
        %v2020 = vpow.pop %v2019
        %v2021 = vsel %vm1981, %v2006, 0.0
        %v2022 = vsel %vm1981, %v2008, 0.0
        %v2023 = vadd.f32 %v2021, %v2022
        %v2024 = vsel %vm1981, %v2010, 0.0
        %v2025 = vadd.f32 %v2023, %v2024
        %v2026 = vsel %vm1981, %v2012, 0.0
        %v2027 = vadd.f32 %v2025, %v2026
        %v2028 = vsel %vm1981, %v2014, 0.0
        %v2029 = vadd.f32 %v2027, %v2028
        %v2030 = vsel %vm1981, %v2016, 0.0
        %v2031 = vadd.f32 %v2029, %v2030
        %v2032 = vsel %vm1981, %v2018, 0.0
        %v2033 = vadd.f32 %v2031, %v2032
        %v2034 = vsel %vm1981, %v2020, 0.0
        %v2035 = vadd.f32 %v2033, %v2034
        %v2036 = vrcp.pop %v2035
        %v2037 = vmul.f32 %v2006, %v2036
        %v2038 = vmul.f32 %v2008, %v2036
        %v2039 = vmul.f32 %v2010, %v2036
        %v2040 = vmul.f32 %v2012, %v2036
        %v2041 = vmul.f32 %v2014, %v2036
        %v2042 = vmul.f32 %v2016, %v2036
        %v2043 = vmul.f32 %v2018, %v2036
        %v2044 = vmul.f32 %v2020, %v2036
        %v2046 = vsel %vm1981, %v2037, 0
        %2048 = vmatprep.subr.mxu0 0.0
        %2049 = vmatpush1.msra.mxu0 %v1364
        %2050 = vmatprep.subr.mxu0 0.0
        %2051 = vmatpush1.msra.mxu0 0.0
        %2052 = vmatprep.subr.mxu0 0.0
        %2053 = vmatpush1.msra.mxu0 0.0
        %2054 = vmatprep.subr.mxu0 0.0
        %2055 = vmatpush1.msra.mxu0 0.0
        %2056 = vmatprep.subr.mxu0 0.0
        %2057 = vmatpush1.msra.mxu0 0.0
        %2058 = vmatprep.subr.mxu0 0.0
        %2059 = vmatpush1.msra.mxu0 0.0
        %2060 = vmatprep.subr.mxu0 0.0
        %2061 = vmatpush1.msra.mxu0 0.0
        %2062 = vmatprep.subr.mxu0 0.0
        %2063 = vmatpush1.msra.mxu0 0.0
        %2064 = vmatprep.subr.mxu0 0.0
        %2065 = vmatpush1.msra.mxu0 0.0
        %2066 = vmatprep.subr.mxu0 0.0
        %2067 = vmatpush1.msra.mxu0 0.0
        %2068 = vmatprep.subr.mxu0 0.0
        %2069 = vmatpush1.msra.mxu0 0.0
        %2070 = vmatprep.subr.mxu0 0.0
        %2071 = vmatpush1.msra.mxu0 0.0
        %2072 = vmatprep.subr.mxu0 0.0
        %2073 = vmatpush1.msra.mxu0 0.0
        %2074 = vmatprep.subr.mxu0 0.0
        %2075 = vmatpush1.msra.mxu0 0.0
        %2076 = vmatprep.subr.mxu0 0.0
        %2077 = vmatpush1.msra.mxu0 0.0
        %2078 = vmatprep.subr.mxu0 0.0
        %2079 = vmatpush1.msra.mxu0 0.0
        %2080 = vmatprep.subr.mxu0 0.0
        %2081 = vmatpush1.msra.mxu0 0.0
        %2082 = vmatprep.subr.mxu0 0.0
        %2083 = vmatpush1.msra.mxu0 0.0
        %2084 = vmatprep.subr.mxu0 0.0
        %2085 = vmatpush1.msra.mxu0 0.0
        %2086 = vmatprep.subr.mxu0 0.0
        %2087 = vmatpush1.msra.mxu0 0.0
        %2088 = vmatprep.subr.mxu0 0.0
        %2089 = vmatpush1.msra.mxu0 0.0
        %2090 = vmatprep.subr.mxu0 0.0
        %2091 = vmatpush1.msra.mxu0 0.0
        %2092 = vmatprep.subr.mxu0 0.0
        %2093 = vmatpush1.msra.mxu0 0.0
        %2094 = vmatprep.subr.mxu0 0.0
        %2095 = vmatpush1.msra.mxu0 0.0
        %2096 = vmatprep.subr.mxu0 0.0
        %2097 = vmatpush1.msra.mxu0 0.0
        %2098 = vmatprep.subr.mxu0 0.0
        %2099 = vmatpush1.msra.mxu0 0.0
        %2100 = vmatprep.subr.mxu0 0.0
        %2101 = vmatpush1.msra.mxu0 0.0
        %2102 = vmatprep.subr.mxu0 0.0
        %2103 = vmatpush1.msra.mxu0 0.0
        %2104 = vmatprep.subr.mxu0 0.0
        %2105 = vmatpush1.msra.mxu0 0.0
        %2106 = vmatprep.subr.mxu0 0.0
        %2107 = vmatpush1.msra.mxu0 0.0
        %2108 = vmatprep.subr.mxu0 0.0
        %2109 = vmatpush1.msra.mxu0 0.0
        %2110 = vmatprep.subr.mxu0 0.0
        %2111 = vmatpush1.msra.mxu0 0.0
        %2112 = vmatprep.mubr.f32.mxu0 0.0
        %2113 = vmatmul.mubr.f32.gmra.mrb[0].mxu0 %v2046
        %v2114 = vpop.f32.mrb[0].mxu0
        %v2115 = vadd.f32 0.0, %v2114
        %v2116 = vpop.f32.mrb[0].mxu0
        %2117 = vdwg.mxu0
        %v2119 = vsel %vm1981, %v2038, 0
        %2121 = vmatprep.subr.mxu0 0.0
        %2122 = vmatpush1.msra.mxu0 %v1365
        %2123 = vmatprep.subr.mxu0 0.0
        %2124 = vmatpush1.msra.mxu0 0.0
        %2125 = vmatprep.subr.mxu0 0.0
        %2126 = vmatpush1.msra.mxu0 0.0
        %2127 = vmatprep.subr.mxu0 0.0
        %2128 = vmatpush1.msra.mxu0 0.0
        %2129 = vmatprep.subr.mxu0 0.0
        %2130 = vmatpush1.msra.mxu0 0.0
        %2131 = vmatprep.subr.mxu0 0.0
        %2132 = vmatpush1.msra.mxu0 0.0
        %2133 = vmatprep.subr.mxu0 0.0
        %2134 = vmatpush1.msra.mxu0 0.0
        %2135 = vmatprep.subr.mxu0 0.0
        %2136 = vmatpush1.msra.mxu0 0.0
        %2137 = vmatprep.subr.mxu0 0.0
        %2138 = vmatpush1.msra.mxu0 0.0
        %2139 = vmatprep.subr.mxu0 0.0
        %2140 = vmatpush1.msra.mxu0 0.0
        %2141 = vmatprep.subr.mxu0 0.0
        %2142 = vmatpush1.msra.mxu0 0.0
        %2143 = vmatprep.subr.mxu0 0.0
        %2144 = vmatpush1.msra.mxu0 0.0
        %2145 = vmatprep.subr.mxu0 0.0
        %2146 = vmatpush1.msra.mxu0 0.0
        %2147 = vmatprep.subr.mxu0 0.0
        %2148 = vmatpush1.msra.mxu0 0.0
        %2149 = vmatprep.subr.mxu0 0.0
        %2150 = vmatpush1.msra.mxu0 0.0
        %2151 = vmatprep.subr.mxu0 0.0
        %2152 = vmatpush1.msra.mxu0 0.0
        %2153 = vmatprep.subr.mxu0 0.0
        %2154 = vmatpush1.msra.mxu0 0.0
        %2155 = vmatprep.subr.mxu0 0.0
        %2156 = vmatpush1.msra.mxu0 0.0
        %2157 = vmatprep.subr.mxu0 0.0
        %2158 = vmatpush1.msra.mxu0 0.0
        %2159 = vmatprep.subr.mxu0 0.0
        %2160 = vmatpush1.msra.mxu0 0.0
        %2161 = vmatprep.subr.mxu0 0.0
        %2162 = vmatpush1.msra.mxu0 0.0
        %2163 = vmatprep.subr.mxu0 0.0
        %2164 = vmatpush1.msra.mxu0 0.0
        %2165 = vmatprep.subr.mxu0 0.0
        %2166 = vmatpush1.msra.mxu0 0.0
        %2167 = vmatprep.subr.mxu0 0.0
        %2168 = vmatpush1.msra.mxu0 0.0
        %2169 = vmatprep.subr.mxu0 0.0
        %2170 = vmatpush1.msra.mxu0 0.0
        %2171 = vmatprep.subr.mxu0 0.0
        %2172 = vmatpush1.msra.mxu0 0.0
        %2173 = vmatprep.subr.mxu0 0.0
        %2174 = vmatpush1.msra.mxu0 0.0
        %2175 = vmatprep.subr.mxu0 0.0
        %2176 = vmatpush1.msra.mxu0 0.0
        %2177 = vmatprep.subr.mxu0 0.0
        %2178 = vmatpush1.msra.mxu0 0.0
        %2179 = vmatprep.subr.mxu0 0.0
        %2180 = vmatpush1.msra.mxu0 0.0
        %2181 = vmatprep.subr.mxu0 0.0
        %2182 = vmatpush1.msra.mxu0 0.0
        %2183 = vmatprep.subr.mxu0 0.0
        %2184 = vmatpush1.msra.mxu0 0.0
        %2185 = vmatprep.mubr.f32.mxu0 0.0
        %2186 = vmatmul.mubr.f32.gmra.mrb[0].mxu0 %v2119
        %v2187 = vpop.f32.mrb[0].mxu0
        %v2188 = vadd.f32 0.0, %v2187
        %v2189 = vpop.f32.mrb[0].mxu0
        %2190 = vdwg.mxu0
        %v2192 = vsel %vm1981, %v2039, 0
        %2194 = vmatprep.subr.mxu0 0.0
        %2195 = vmatpush1.msra.mxu0 %v1366
        %2196 = vmatprep.subr.mxu0 0.0
        %2197 = vmatpush1.msra.mxu0 0.0
        %2198 = vmatprep.subr.mxu0 0.0
        %2199 = vmatpush1.msra.mxu0 0.0
        %2200 = vmatprep.subr.mxu0 0.0
        %2201 = vmatpush1.msra.mxu0 0.0
        %2202 = vmatprep.subr.mxu0 0.0
        %2203 = vmatpush1.msra.mxu0 0.0
        %2204 = vmatprep.subr.mxu0 0.0
        %2205 = vmatpush1.msra.mxu0 0.0
        %2206 = vmatprep.subr.mxu0 0.0
        %2207 = vmatpush1.msra.mxu0 0.0
        %2208 = vmatprep.subr.mxu0 0.0
        %2209 = vmatpush1.msra.mxu0 0.0
        %2210 = vmatprep.subr.mxu0 0.0
        %2211 = vmatpush1.msra.mxu0 0.0
        %2212 = vmatprep.subr.mxu0 0.0
        %2213 = vmatpush1.msra.mxu0 0.0
        %2214 = vmatprep.subr.mxu0 0.0
        %2215 = vmatpush1.msra.mxu0 0.0
        %2216 = vmatprep.subr.mxu0 0.0
        %2217 = vmatpush1.msra.mxu0 0.0
        %2218 = vmatprep.subr.mxu0 0.0
        %2219 = vmatpush1.msra.mxu0 0.0
        %2220 = vmatprep.subr.mxu0 0.0
        %2221 = vmatpush1.msra.mxu0 0.0
        %2222 = vmatprep.subr.mxu0 0.0
        %2223 = vmatpush1.msra.mxu0 0.0
        %2224 = vmatprep.subr.mxu0 0.0
        %2225 = vmatpush1.msra.mxu0 0.0
        %2226 = vmatprep.subr.mxu0 0.0
        %2227 = vmatpush1.msra.mxu0 0.0
        %2228 = vmatprep.subr.mxu0 0.0
        %2229 = vmatpush1.msra.mxu0 0.0
        %2230 = vmatprep.subr.mxu0 0.0
        %2231 = vmatpush1.msra.mxu0 0.0
        %2232 = vmatprep.subr.mxu0 0.0
        %2233 = vmatpush1.msra.mxu0 0.0
        %2234 = vmatprep.subr.mxu0 0.0
        %2235 = vmatpush1.msra.mxu0 0.0
        %2236 = vmatprep.subr.mxu0 0.0
        %2237 = vmatpush1.msra.mxu0 0.0
        %2238 = vmatprep.subr.mxu0 0.0
        %2239 = vmatpush1.msra.mxu0 0.0
        %2240 = vmatprep.subr.mxu0 0.0
        %2241 = vmatpush1.msra.mxu0 0.0
        %2242 = vmatprep.subr.mxu0 0.0
        %2243 = vmatpush1.msra.mxu0 0.0
        %2244 = vmatprep.subr.mxu0 0.0
        %2245 = vmatpush1.msra.mxu0 0.0
        %2246 = vmatprep.subr.mxu0 0.0
        %2247 = vmatpush1.msra.mxu0 0.0
        %2248 = vmatprep.subr.mxu0 0.0
        %2249 = vmatpush1.msra.mxu0 0.0
        %2250 = vmatprep.subr.mxu0 0.0
        %2251 = vmatpush1.msra.mxu0 0.0
        %2252 = vmatprep.subr.mxu0 0.0
        %2253 = vmatpush1.msra.mxu0 0.0
        %2254 = vmatprep.subr.mxu0 0.0
        %2255 = vmatpush1.msra.mxu0 0.0
        %2256 = vmatprep.subr.mxu0 0.0
        %2257 = vmatpush1.msra.mxu0 0.0
        %2258 = vmatprep.mubr.f32.mxu0 0.0
        %2259 = vmatmul.mubr.f32.gmra.mrb[0].mxu0 %v2192
        %v2260 = vpop.f32.mrb[0].mxu0
        %v2261 = vadd.f32 0.0, %v2260
        %v2262 = vpop.f32.mrb[0].mxu0
        %2263 = vdwg.mxu0
        %v2265 = vsel %vm1981, %v2040, 0
        %2267 = vmatprep.subr.mxu0 0.0
        %2268 = vmatpush1.msra.mxu0 %v1367
        %2269 = vmatprep.subr.mxu0 0.0
        %2270 = vmatpush1.msra.mxu0 0.0
        %2271 = vmatprep.subr.mxu0 0.0
        %2272 = vmatpush1.msra.mxu0 0.0
        %2273 = vmatprep.subr.mxu0 0.0
        %2274 = vmatpush1.msra.mxu0 0.0
        %2275 = vmatprep.subr.mxu0 0.0
        %2276 = vmatpush1.msra.mxu0 0.0
        %2277 = vmatprep.subr.mxu0 0.0
        %2278 = vmatpush1.msra.mxu0 0.0
        %2279 = vmatprep.subr.mxu0 0.0
        %2280 = vmatpush1.msra.mxu0 0.0
        %2281 = vmatprep.subr.mxu0 0.0
        %2282 = vmatpush1.msra.mxu0 0.0
        %2283 = vmatprep.subr.mxu0 0.0
        %2284 = vmatpush1.msra.mxu0 0.0
        %2285 = vmatprep.subr.mxu0 0.0
        %2286 = vmatpush1.msra.mxu0 0.0
        %2287 = vmatprep.subr.mxu0 0.0
        %2288 = vmatpush1.msra.mxu0 0.0
        %2289 = vmatprep.subr.mxu0 0.0
        %2290 = vmatpush1.msra.mxu0 0.0
        %2291 = vmatprep.subr.mxu0 0.0
        %2292 = vmatpush1.msra.mxu0 0.0
        %2293 = vmatprep.subr.mxu0 0.0
        %2294 = vmatpush1.msra.mxu0 0.0
        %2295 = vmatprep.subr.mxu0 0.0
        %2296 = vmatpush1.msra.mxu0 0.0
        %2297 = vmatprep.subr.mxu0 0.0
        %2298 = vmatpush1.msra.mxu0 0.0
        %2299 = vmatprep.subr.mxu0 0.0
        %2300 = vmatpush1.msra.mxu0 0.0
        %2301 = vmatprep.subr.mxu0 0.0
        %2302 = vmatpush1.msra.mxu0 0.0
        %2303 = vmatprep.subr.mxu0 0.0
        %2304 = vmatpush1.msra.mxu0 0.0
        %2305 = vmatprep.subr.mxu0 0.0
        %2306 = vmatpush1.msra.mxu0 0.0
        %2307 = vmatprep.subr.mxu0 0.0
        %2308 = vmatpush1.msra.mxu0 0.0
        %2309 = vmatprep.subr.mxu0 0.0
        %2310 = vmatpush1.msra.mxu0 0.0
        %2311 = vmatprep.subr.mxu0 0.0
        %2312 = vmatpush1.msra.mxu0 0.0
        %2313 = vmatprep.subr.mxu0 0.0
        %2314 = vmatpush1.msra.mxu0 0.0
        %2315 = vmatprep.subr.mxu0 0.0
        %2316 = vmatpush1.msra.mxu0 0.0
        %2317 = vmatprep.subr.mxu0 0.0
        %2318 = vmatpush1.msra.mxu0 0.0
        %2319 = vmatprep.subr.mxu0 0.0
        %2320 = vmatpush1.msra.mxu0 0.0
        %2321 = vmatprep.subr.mxu0 0.0
        %2322 = vmatpush1.msra.mxu0 0.0
        %2323 = vmatprep.subr.mxu0 0.0
        %2324 = vmatpush1.msra.mxu0 0.0
        %2325 = vmatprep.subr.mxu0 0.0
        %2326 = vmatpush1.msra.mxu0 0.0
        %2327 = vmatprep.subr.mxu0 0.0
        %2328 = vmatpush1.msra.mxu0 0.0
        %2329 = vmatprep.subr.mxu0 0.0
        %2330 = vmatpush1.msra.mxu0 0.0
        %2331 = vmatprep.mubr.f32.mxu0 0.0
        %2332 = vmatmul.mubr.f32.gmra.mrb[0].mxu0 %v2265
        %v2333 = vpop.f32.mrb[0].mxu0
        %v2334 = vadd.f32 0.0, %v2333
        %v2335 = vpop.f32.mrb[0].mxu0
        %2336 = vdwg.mxu0
        %v2338 = vsel %vm1981, %v2041, 0
        %2340 = vmatprep.subr.mxu0 0.0
        %2341 = vmatpush1.msra.mxu0 %v1368
        %2342 = vmatprep.subr.mxu0 0.0
        %2343 = vmatpush1.msra.mxu0 0.0
        %2344 = vmatprep.subr.mxu0 0.0
        %2345 = vmatpush1.msra.mxu0 0.0
        %2346 = vmatprep.subr.mxu0 0.0
        %2347 = vmatpush1.msra.mxu0 0.0
        %2348 = vmatprep.subr.mxu0 0.0
        %2349 = vmatpush1.msra.mxu0 0.0
        %2350 = vmatprep.subr.mxu0 0.0
        %2351 = vmatpush1.msra.mxu0 0.0
        %2352 = vmatprep.subr.mxu0 0.0
        %2353 = vmatpush1.msra.mxu0 0.0
        %2354 = vmatprep.subr.mxu0 0.0
        %2355 = vmatpush1.msra.mxu0 0.0
        %2356 = vmatprep.subr.mxu0 0.0
        %2357 = vmatpush1.msra.mxu0 0.0
        %2358 = vmatprep.subr.mxu0 0.0
        %2359 = vmatpush1.msra.mxu0 0.0
        %2360 = vmatprep.subr.mxu0 0.0
        %2361 = vmatpush1.msra.mxu0 0.0
        %2362 = vmatprep.subr.mxu0 0.0
        %2363 = vmatpush1.msra.mxu0 0.0
        %2364 = vmatprep.subr.mxu0 0.0
        %2365 = vmatpush1.msra.mxu0 0.0
        %2366 = vmatprep.subr.mxu0 0.0
        %2367 = vmatpush1.msra.mxu0 0.0
        %2368 = vmatprep.subr.mxu0 0.0
        %2369 = vmatpush1.msra.mxu0 0.0
        %2370 = vmatprep.subr.mxu0 0.0
        %2371 = vmatpush1.msra.mxu0 0.0
        %2372 = vmatprep.subr.mxu0 0.0
        %2373 = vmatpush1.msra.mxu0 0.0
        %2374 = vmatprep.subr.mxu0 0.0
        %2375 = vmatpush1.msra.mxu0 0.0
        %2376 = vmatprep.subr.mxu0 0.0
        %2377 = vmatpush1.msra.mxu0 0.0
        %2378 = vmatprep.subr.mxu0 0.0
        %2379 = vmatpush1.msra.mxu0 0.0
        %2380 = vmatprep.subr.mxu0 0.0
        %2381 = vmatpush1.msra.mxu0 0.0
        %2382 = vmatprep.subr.mxu0 0.0
        %2383 = vmatpush1.msra.mxu0 0.0
        %2384 = vmatprep.subr.mxu0 0.0
        %2385 = vmatpush1.msra.mxu0 0.0
        %2386 = vmatprep.subr.mxu0 0.0
        %2387 = vmatpush1.msra.mxu0 0.0
        %2388 = vmatprep.subr.mxu0 0.0
        %2389 = vmatpush1.msra.mxu0 0.0
        %2390 = vmatprep.subr.mxu0 0.0
        %2391 = vmatpush1.msra.mxu0 0.0
        %2392 = vmatprep.subr.mxu0 0.0
        %2393 = vmatpush1.msra.mxu0 0.0
        %2394 = vmatprep.subr.mxu0 0.0
        %2395 = vmatpush1.msra.mxu0 0.0
        %2396 = vmatprep.subr.mxu0 0.0
        %2397 = vmatpush1.msra.mxu0 0.0
        %2398 = vmatprep.subr.mxu0 0.0
        %2399 = vmatpush1.msra.mxu0 0.0
        %2400 = vmatprep.subr.mxu0 0.0
        %2401 = vmatpush1.msra.mxu0 0.0
        %2402 = vmatprep.subr.mxu0 0.0
        %2403 = vmatpush1.msra.mxu0 0.0
        %2404 = vmatprep.mubr.f32.mxu0 0.0
        %2405 = vmatmul.mubr.f32.gmra.mrb[0].mxu0 %v2338
        %v2406 = vpop.f32.mrb[0].mxu0
        %v2407 = vadd.f32 0.0, %v2406
        %v2408 = vpop.f32.mrb[0].mxu0
        %2409 = vdwg.mxu0
        %v2411 = vsel %vm1981, %v2042, 0
        %2413 = vmatprep.subr.mxu0 0.0
        %2414 = vmatpush1.msra.mxu0 %v1369
        %2415 = vmatprep.subr.mxu0 0.0
        %2416 = vmatpush1.msra.mxu0 0.0
        %2417 = vmatprep.subr.mxu0 0.0
        %2418 = vmatpush1.msra.mxu0 0.0
        %2419 = vmatprep.subr.mxu0 0.0
        %2420 = vmatpush1.msra.mxu0 0.0
        %2421 = vmatprep.subr.mxu0 0.0
        %2422 = vmatpush1.msra.mxu0 0.0
        %2423 = vmatprep.subr.mxu0 0.0
        %2424 = vmatpush1.msra.mxu0 0.0
        %2425 = vmatprep.subr.mxu0 0.0
        %2426 = vmatpush1.msra.mxu0 0.0
        %2427 = vmatprep.subr.mxu0 0.0
        %2428 = vmatpush1.msra.mxu0 0.0
        %2429 = vmatprep.subr.mxu0 0.0
        %2430 = vmatpush1.msra.mxu0 0.0
        %2431 = vmatprep.subr.mxu0 0.0
        %2432 = vmatpush1.msra.mxu0 0.0
        %2433 = vmatprep.subr.mxu0 0.0
        %2434 = vmatpush1.msra.mxu0 0.0
        %2435 = vmatprep.subr.mxu0 0.0
        %2436 = vmatpush1.msra.mxu0 0.0
        %2437 = vmatprep.subr.mxu0 0.0
        %2438 = vmatpush1.msra.mxu0 0.0
        %2439 = vmatprep.subr.mxu0 0.0
        %2440 = vmatpush1.msra.mxu0 0.0
        %2441 = vmatprep.subr.mxu0 0.0
        %2442 = vmatpush1.msra.mxu0 0.0
        %2443 = vmatprep.subr.mxu0 0.0
        %2444 = vmatpush1.msra.mxu0 0.0
        %2445 = vmatprep.subr.mxu0 0.0
        %2446 = vmatpush1.msra.mxu0 0.0
        %2447 = vmatprep.subr.mxu0 0.0
        %2448 = vmatpush1.msra.mxu0 0.0
        %2449 = vmatprep.subr.mxu0 0.0
        %2450 = vmatpush1.msra.mxu0 0.0
        %2451 = vmatprep.subr.mxu0 0.0
        %2452 = vmatpush1.msra.mxu0 0.0
        %2453 = vmatprep.subr.mxu0 0.0
        %2454 = vmatpush1.msra.mxu0 0.0
        %2455 = vmatprep.subr.mxu0 0.0
        %2456 = vmatpush1.msra.mxu0 0.0
        %2457 = vmatprep.subr.mxu0 0.0
        %2458 = vmatpush1.msra.mxu0 0.0
        %2459 = vmatprep.subr.mxu0 0.0
        %2460 = vmatpush1.msra.mxu0 0.0
        %2461 = vmatprep.subr.mxu0 0.0
        %2462 = vmatpush1.msra.mxu0 0.0
        %2463 = vmatprep.subr.mxu0 0.0
        %2464 = vmatpush1.msra.mxu0 0.0
        %2465 = vmatprep.subr.mxu0 0.0
        %2466 = vmatpush1.msra.mxu0 0.0
        %2467 = vmatprep.subr.mxu0 0.0
        %2468 = vmatpush1.msra.mxu0 0.0
        %2469 = vmatprep.subr.mxu0 0.0
        %2470 = vmatpush1.msra.mxu0 0.0
        %2471 = vmatprep.subr.mxu0 0.0
        %2472 = vmatpush1.msra.mxu0 0.0
        %2473 = vmatprep.subr.mxu0 0.0
        %2474 = vmatpush1.msra.mxu0 0.0
        %2475 = vmatprep.subr.mxu0 0.0
        %2476 = vmatpush1.msra.mxu0 0.0
        %2477 = vmatprep.mubr.f32.mxu0 0.0
        %2478 = vmatmul.mubr.f32.gmra.mrb[0].mxu0 %v2411
        %v2479 = vpop.f32.mrb[0].mxu0
        %v2480 = vadd.f32 0.0, %v2479
        %v2481 = vpop.f32.mrb[0].mxu0
        %2482 = vdwg.mxu0
        %v2484 = vsel %vm1981, %v2043, 0
        %2486 = vmatprep.subr.mxu0 0.0
        %2487 = vmatpush1.msra.mxu0 %v1370
        %2488 = vmatprep.subr.mxu0 0.0
        %2489 = vmatpush1.msra.mxu0 0.0
        %2490 = vmatprep.subr.mxu0 0.0
        %2491 = vmatpush1.msra.mxu0 0.0
        %2492 = vmatprep.subr.mxu0 0.0
        %2493 = vmatpush1.msra.mxu0 0.0
        %2494 = vmatprep.subr.mxu0 0.0
        %2495 = vmatpush1.msra.mxu0 0.0
        %2496 = vmatprep.subr.mxu0 0.0
        %2497 = vmatpush1.msra.mxu0 0.0
        %2498 = vmatprep.subr.mxu0 0.0
        %2499 = vmatpush1.msra.mxu0 0.0
        %2500 = vmatprep.subr.mxu0 0.0
        %2501 = vmatpush1.msra.mxu0 0.0
        %2502 = vmatprep.subr.mxu0 0.0
        %2503 = vmatpush1.msra.mxu0 0.0
        %2504 = vmatprep.subr.mxu0 0.0
        %2505 = vmatpush1.msra.mxu0 0.0
        %2506 = vmatprep.subr.mxu0 0.0
        %2507 = vmatpush1.msra.mxu0 0.0
        %2508 = vmatprep.subr.mxu0 0.0
        %2509 = vmatpush1.msra.mxu0 0.0
        %2510 = vmatprep.subr.mxu0 0.0
        %2511 = vmatpush1.msra.mxu0 0.0
        %2512 = vmatprep.subr.mxu0 0.0
        %2513 = vmatpush1.msra.mxu0 0.0
        %2514 = vmatprep.subr.mxu0 0.0
        %2515 = vmatpush1.msra.mxu0 0.0
        %2516 = vmatprep.subr.mxu0 0.0
        %2517 = vmatpush1.msra.mxu0 0.0
        %2518 = vmatprep.subr.mxu0 0.0
        %2519 = vmatpush1.msra.mxu0 0.0
        %2520 = vmatprep.subr.mxu0 0.0
        %2521 = vmatpush1.msra.mxu0 0.0
        %2522 = vmatprep.subr.mxu0 0.0
        %2523 = vmatpush1.msra.mxu0 0.0
        %2524 = vmatprep.subr.mxu0 0.0
        %2525 = vmatpush1.msra.mxu0 0.0
        %2526 = vmatprep.subr.mxu0 0.0
        %2527 = vmatpush1.msra.mxu0 0.0
        %2528 = vmatprep.subr.mxu0 0.0
        %2529 = vmatpush1.msra.mxu0 0.0
        %2530 = vmatprep.subr.mxu0 0.0
        %2531 = vmatpush1.msra.mxu0 0.0
        %2532 = vmatprep.subr.mxu0 0.0
        %2533 = vmatpush1.msra.mxu0 0.0
        %2534 = vmatprep.subr.mxu0 0.0
        %2535 = vmatpush1.msra.mxu0 0.0
        %2536 = vmatprep.subr.mxu0 0.0
        %2537 = vmatpush1.msra.mxu0 0.0
        %2538 = vmatprep.subr.mxu0 0.0
        %2539 = vmatpush1.msra.mxu0 0.0
        %2540 = vmatprep.subr.mxu0 0.0
        %2541 = vmatpush1.msra.mxu0 0.0
        %2542 = vmatprep.subr.mxu0 0.0
        %2543 = vmatpush1.msra.mxu0 0.0
        %2544 = vmatprep.subr.mxu0 0.0
        %2545 = vmatpush1.msra.mxu0 0.0
        %2546 = vmatprep.subr.mxu0 0.0
        %2547 = vmatpush1.msra.mxu0 0.0
        %2548 = vmatprep.subr.mxu0 0.0
        %2549 = vmatpush1.msra.mxu0 0.0
        %2550 = vmatprep.mubr.f32.mxu0 0.0
        %2551 = vmatmul.mubr.f32.gmra.mrb[0].mxu0 %v2484
        %v2552 = vpop.f32.mrb[0].mxu0
        %v2553 = vadd.f32 0.0, %v2552
        %v2554 = vpop.f32.mrb[0].mxu0
        %2555 = vdwg.mxu0
        %v2557 = vsel %vm1981, %v2044, 0
        %2559 = vmatprep.subr.mxu0 0.0
        %2560 = vmatpush1.msra.mxu0 %v1371
        %2561 = vmatprep.subr.mxu0 0.0
        %2562 = vmatpush1.msra.mxu0 0.0
        %2563 = vmatprep.subr.mxu0 0.0
        %2564 = vmatpush1.msra.mxu0 0.0
        %2565 = vmatprep.subr.mxu0 0.0
        %2566 = vmatpush1.msra.mxu0 0.0
        %2567 = vmatprep.subr.mxu0 0.0
        %2568 = vmatpush1.msra.mxu0 0.0
        %2569 = vmatprep.subr.mxu0 0.0
        %2570 = vmatpush1.msra.mxu0 0.0
        %2571 = vmatprep.subr.mxu0 0.0
        %2572 = vmatpush1.msra.mxu0 0.0
        %2573 = vmatprep.subr.mxu0 0.0
        %2574 = vmatpush1.msra.mxu0 0.0
        %2575 = vmatprep.subr.mxu0 0.0
        %2576 = vmatpush1.msra.mxu0 0.0
        %2577 = vmatprep.subr.mxu0 0.0
        %2578 = vmatpush1.msra.mxu0 0.0
        %2579 = vmatprep.subr.mxu0 0.0
        %2580 = vmatpush1.msra.mxu0 0.0
        %2581 = vmatprep.subr.mxu0 0.0
        %2582 = vmatpush1.msra.mxu0 0.0
        %2583 = vmatprep.subr.mxu0 0.0
        %2584 = vmatpush1.msra.mxu0 0.0
        %2585 = vmatprep.subr.mxu0 0.0
        %2586 = vmatpush1.msra.mxu0 0.0
        %2587 = vmatprep.subr.mxu0 0.0
        %2588 = vmatpush1.msra.mxu0 0.0
        %2589 = vmatprep.subr.mxu0 0.0
        %2590 = vmatpush1.msra.mxu0 0.0
        %2591 = vmatprep.subr.mxu0 0.0
        %2592 = vmatpush1.msra.mxu0 0.0
        %2593 = vmatprep.subr.mxu0 0.0
        %2594 = vmatpush1.msra.mxu0 0.0
        %2595 = vmatprep.subr.mxu0 0.0
        %2596 = vmatpush1.msra.mxu0 0.0
        %2597 = vmatprep.subr.mxu0 0.0
        %2598 = vmatpush1.msra.mxu0 0.0
        %2599 = vmatprep.subr.mxu0 0.0
        %2600 = vmatpush1.msra.mxu0 0.0
        %2601 = vmatprep.subr.mxu0 0.0
        %2602 = vmatpush1.msra.mxu0 0.0
        %2603 = vmatprep.subr.mxu0 0.0
        %2604 = vmatpush1.msra.mxu0 0.0
        %2605 = vmatprep.subr.mxu0 0.0
        %2606 = vmatpush1.msra.mxu0 0.0
        %2607 = vmatprep.subr.mxu0 0.0
        %2608 = vmatpush1.msra.mxu0 0.0
        %2609 = vmatprep.subr.mxu0 0.0
        %2610 = vmatpush1.msra.mxu0 0.0
        %2611 = vmatprep.subr.mxu0 0.0
        %2612 = vmatpush1.msra.mxu0 0.0
        %2613 = vmatprep.subr.mxu0 0.0
        %2614 = vmatpush1.msra.mxu0 0.0
        %2615 = vmatprep.subr.mxu0 0.0
        %2616 = vmatpush1.msra.mxu0 0.0
        %2617 = vmatprep.subr.mxu0 0.0
        %2618 = vmatpush1.msra.mxu0 0.0
        %2619 = vmatprep.subr.mxu0 0.0
        %2620 = vmatpush1.msra.mxu0 0.0
        %2621 = vmatprep.subr.mxu0 0.0
        %2622 = vmatpush1.msra.mxu0 0.0
        %2623 = vmatprep.mubr.f32.mxu0 0.0
        %2624 = vmatmul.mubr.f32.gmra.mrb[0].mxu0 %v2557
        %v2625 = vpop.f32.mrb[0].mxu0
        %v2626 = vadd.f32 0.0, %v2625
        %v2627 = vpop.f32.mrb[0].mxu0
        %2628 = vdwg.mxu0
        %v2629 = vcombine.low %v2115, %v2261
        %v2630 = vcombine.high %v2115, %v2261
        %v2632 = vunpack.c.l.s4 1983009808
        %v2633 = vunpack.c.0.s8 %v2632
        %v2634 = vlaneseq
        %v2635 = vshrl.u32 %v2634, 7
        %v2636 = vsub.s32 %v2633, %v2635
        %v2637 = vrot.slane %v2629, %v2636
        %v2639 = vunpack.c.l.s4 1983009808
        %v2640 = vunpack.c.0.s8 %v2639
        %v2641 = vlaneseq
        %v2642 = vshrl.u32 %v2641, 7
        %v2643 = vsub.s32 %v2640, %v2642
        %v2644 = vrot.slane %v2630, %v2643
        %v2645 = vcombine.low %v2188, %v2334
        %v2646 = vcombine.high %v2188, %v2334
        %v2648 = vunpack.c.l.s4 1983009808
        %v2649 = vunpack.c.0.s8 %v2648
        %v2650 = vlaneseq
        %v2651 = vshrl.u32 %v2650, 7
        %v2652 = vsub.s32 %v2649, %v2651
        %v2653 = vrot.slane %v2645, %v2652
        %v2655 = vunpack.c.l.s4 1983009808
        %v2656 = vunpack.c.0.s8 %v2655
        %v2657 = vlaneseq
        %v2658 = vshrl.u32 %v2657, 7
        %v2659 = vsub.s32 %v2656, %v2658
        %v2660 = vrot.slane %v2646, %v2659
        %v2661 = vcombine.low %v2407, %v2553
        %v2662 = vcombine.high %v2407, %v2553
        %v2664 = vunpack.c.l.s4 1983009808
        %v2665 = vunpack.c.0.s8 %v2664
        %v2666 = vlaneseq
        %v2667 = vshrl.u32 %v2666, 7
        %v2668 = vsub.s32 %v2665, %v2667
        %v2669 = vrot.slane %v2661, %v2668
        %v2671 = vunpack.c.l.s4 1983009808
        %v2672 = vunpack.c.0.s8 %v2671
        %v2673 = vlaneseq
        %v2674 = vshrl.u32 %v2673, 7
        %v2675 = vsub.s32 %v2672, %v2674
        %v2676 = vrot.slane %v2662, %v2675
        %v2677 = vcombine.low %v2480, %v2626
        %v2678 = vcombine.high %v2480, %v2626
        %v2680 = vunpack.c.l.s4 1983009808
        %v2681 = vunpack.c.0.s8 %v2680
        %v2682 = vlaneseq
        %v2683 = vshrl.u32 %v2682, 7
        %v2684 = vsub.s32 %v2681, %v2683
        %v2685 = vrot.slane %v2677, %v2684
        %v2687 = vunpack.c.l.s4 1983009808
        %v2688 = vunpack.c.0.s8 %v2687
        %v2689 = vlaneseq
        %v2690 = vshrl.u32 %v2689, 7
        %v2691 = vsub.s32 %v2688, %v2690
        %v2692 = vrot.slane %v2678, %v2691
        %v2693 = vcombine.low %v2637, %v2653
        %v2694 = vcombine.high %v2637, %v2653
        %v2696 = vunpack.c.l.s4 1934713408
        %v2697 = vunpack.c.0.s8 %v2696
        %v2698 = vlaneseq
        %v2699 = vshrl.u32 %v2698, 7
        %v2700 = vsub.s32 %v2697, %v2699
        %v2701 = vrot.slane %v2693, %v2700
        %v2703 = vunpack.c.l.s4 1934713408
        %v2704 = vunpack.c.0.s8 %v2703
        %v2705 = vlaneseq
        %v2706 = vshrl.u32 %v2705, 7
        %v2707 = vsub.s32 %v2704, %v2706
        %v2708 = vrot.slane %v2694, %v2707
        %v2709 = vcombine.low %v2644, %v2660
        %v2710 = vcombine.high %v2644, %v2660
        %v2712 = vunpack.c.l.s4 1934713408
        %v2713 = vunpack.c.0.s8 %v2712
        %v2714 = vlaneseq
        %v2715 = vshrl.u32 %v2714, 7
        %v2716 = vsub.s32 %v2713, %v2715
        %v2717 = vrot.slane %v2709, %v2716
        %v2719 = vunpack.c.l.s4 1934713408
        %v2720 = vunpack.c.0.s8 %v2719
        %v2721 = vlaneseq
        %v2722 = vshrl.u32 %v2721, 7
        %v2723 = vsub.s32 %v2720, %v2722
        %v2724 = vrot.slane %v2710, %v2723
        %v2725 = vcombine.low %v2669, %v2685
        %v2726 = vcombine.high %v2669, %v2685
        %v2728 = vunpack.c.l.s4 1934713408
        %v2729 = vunpack.c.0.s8 %v2728
        %v2730 = vlaneseq
        %v2731 = vshrl.u32 %v2730, 7
        %v2732 = vsub.s32 %v2729, %v2731
        %v2733 = vrot.slane %v2725, %v2732
        %v2735 = vunpack.c.l.s4 1934713408
        %v2736 = vunpack.c.0.s8 %v2735
        %v2737 = vlaneseq
        %v2738 = vshrl.u32 %v2737, 7
        %v2739 = vsub.s32 %v2736, %v2738
        %v2740 = vrot.slane %v2726, %v2739
        %v2741 = vcombine.low %v2676, %v2692
        %v2742 = vcombine.high %v2676, %v2692
        %v2744 = vunpack.c.l.s4 1934713408
        %v2745 = vunpack.c.0.s8 %v2744
        %v2746 = vlaneseq
        %v2747 = vshrl.u32 %v2746, 7
        %v2748 = vsub.s32 %v2745, %v2747
        %v2749 = vrot.slane %v2741, %v2748
        %v2751 = vunpack.c.l.s4 1934713408
        %v2752 = vunpack.c.0.s8 %v2751
        %v2753 = vlaneseq
        %v2754 = vshrl.u32 %v2753, 7
        %v2755 = vsub.s32 %v2752, %v2754
        %v2756 = vrot.slane %v2742, %v2755
        %v2757 = vcombine.low %v2701, %v2733
        %v2758 = vcombine.high %v2701, %v2733
        %v2759 = vcombine.low %v2708, %v2740
        %v2760 = vcombine.high %v2708, %v2740
        %v2761 = vcombine.low %v2717, %v2749
        %v2762 = vcombine.high %v2717, %v2749
        %v2763 = vcombine.low %v2724, %v2756
        %v2764 = vcombine.high %v2724, %v2756
        %v2765 = vcombine.low %v2757, %v2759
        %v2766 = vcombine.high %v2757, %v2759
        %v2768 = vunpack.c.l.s4 1983009808
        %v2769 = vunpack.c.0.s8 %v2768
        %v2770 = vlaneseq
        %v2771 = vshrl.u32 %v2770, 7
        %v2772 = vsub.s32 %v2769, %v2771
        %v2773 = vrot.slane %v2765, %v2772
        %v2775 = vunpack.c.l.s4 1983009808
        %v2776 = vunpack.c.0.s8 %v2775
        %v2777 = vlaneseq
        %v2778 = vshrl.u32 %v2777, 7
        %v2779 = vsub.s32 %v2776, %v2778
        %v2780 = vrot.slane %v2766, %v2779
        %v2781 = vcombine.low %v2758, %v2760
        %v2782 = vcombine.high %v2758, %v2760
        %v2784 = vunpack.c.l.s4 1983009808
        %v2785 = vunpack.c.0.s8 %v2784
        %v2786 = vlaneseq
        %v2787 = vshrl.u32 %v2786, 7
        %v2788 = vsub.s32 %v2785, %v2787
        %v2789 = vrot.slane %v2781, %v2788
        %v2791 = vunpack.c.l.s4 1983009808
        %v2792 = vunpack.c.0.s8 %v2791
        %v2793 = vlaneseq
        %v2794 = vshrl.u32 %v2793, 7
        %v2795 = vsub.s32 %v2792, %v2794
        %v2796 = vrot.slane %v2782, %v2795
        %v2797 = vcombine.low %v2761, %v2763
        %v2798 = vcombine.high %v2761, %v2763
        %v2800 = vunpack.c.l.s4 1983009808
        %v2801 = vunpack.c.0.s8 %v2800
        %v2802 = vlaneseq
        %v2803 = vshrl.u32 %v2802, 7
        %v2804 = vsub.s32 %v2801, %v2803
        %v2805 = vrot.slane %v2797, %v2804
        %v2807 = vunpack.c.l.s4 1983009808
        %v2808 = vunpack.c.0.s8 %v2807
        %v2809 = vlaneseq
        %v2810 = vshrl.u32 %v2809, 7
        %v2811 = vsub.s32 %v2808, %v2810
        %v2812 = vrot.slane %v2798, %v2811
        %v2813 = vcombine.low %v2762, %v2764
        %v2814 = vcombine.high %v2762, %v2764
        %v2816 = vunpack.c.l.s4 1983009808
        %v2817 = vunpack.c.0.s8 %v2816
        %v2818 = vlaneseq
        %v2819 = vshrl.u32 %v2818, 7
        %v2820 = vsub.s32 %v2817, %v2819
        %v2821 = vrot.slane %v2813, %v2820
        %v2823 = vunpack.c.l.s4 1983009808
        %v2824 = vunpack.c.0.s8 %v2823
        %v2825 = vlaneseq
        %v2826 = vshrl.u32 %v2825, 7
        %v2827 = vsub.s32 %v2824, %v2826
        %v2828 = vrot.slane %v2814, %v2827
        %v2829 = vcombine.low %v2773, %v2789
        %v2830 = vcombine.high %v2773, %v2789
        %v2832 = vunpack.c.l.s4 1934713408
        %v2833 = vunpack.c.0.s8 %v2832
        %v2834 = vlaneseq
        %v2835 = vshrl.u32 %v2834, 7
        %v2836 = vsub.s32 %v2833, %v2835
        %v2837 = vrot.slane %v2829, %v2836
        %v2839 = vunpack.c.l.s4 1934713408
        %v2840 = vunpack.c.0.s8 %v2839
        %v2841 = vlaneseq
        %v2842 = vshrl.u32 %v2841, 7
        %v2843 = vsub.s32 %v2840, %v2842
        %v2844 = vrot.slane %v2830, %v2843
        %v2845 = vcombine.low %v2780, %v2796
        %v2846 = vcombine.high %v2780, %v2796
        %v2848 = vunpack.c.l.s4 1934713408
        %v2849 = vunpack.c.0.s8 %v2848
        %v2850 = vlaneseq
        %v2851 = vshrl.u32 %v2850, 7
        %v2852 = vsub.s32 %v2849, %v2851
        %v2853 = vrot.slane %v2845, %v2852
        %v2855 = vunpack.c.l.s4 1934713408
        %v2856 = vunpack.c.0.s8 %v2855
        %v2857 = vlaneseq
        %v2858 = vshrl.u32 %v2857, 7
        %v2859 = vsub.s32 %v2856, %v2858
        %v2860 = vrot.slane %v2846, %v2859
        %v2861 = vcombine.low %v2805, %v2821
        %v2862 = vcombine.high %v2805, %v2821
        %v2864 = vunpack.c.l.s4 1934713408
        %v2865 = vunpack.c.0.s8 %v2864
        %v2866 = vlaneseq
        %v2867 = vshrl.u32 %v2866, 7
        %v2868 = vsub.s32 %v2865, %v2867
        %v2869 = vrot.slane %v2861, %v2868
        %v2871 = vunpack.c.l.s4 1934713408
        %v2872 = vunpack.c.0.s8 %v2871
        %v2873 = vlaneseq
        %v2874 = vshrl.u32 %v2873, 7
        %v2875 = vsub.s32 %v2872, %v2874
        %v2876 = vrot.slane %v2862, %v2875
        %v2877 = vcombine.low %v2812, %v2828
        %v2878 = vcombine.high %v2812, %v2828
        %v2880 = vunpack.c.l.s4 1934713408
        %v2881 = vunpack.c.0.s8 %v2880
        %v2882 = vlaneseq
        %v2883 = vshrl.u32 %v2882, 7
        %v2884 = vsub.s32 %v2881, %v2883
        %v2885 = vrot.slane %v2877, %v2884
        %v2887 = vunpack.c.l.s4 1934713408
        %v2888 = vunpack.c.0.s8 %v2887
        %v2889 = vlaneseq
        %v2890 = vshrl.u32 %v2889, 7
        %v2891 = vsub.s32 %v2888, %v2890
        %v2892 = vrot.slane %v2878, %v2891
        %v2893 = vcombine.low %v2837, %v2869
        %v2894 = vcombine.high %v2837, %v2869
        %v2895 = vcombine.low %v2844, %v2876
        %v2896 = vcombine.high %v2844, %v2876
        %v2897 = vcombine.low %v2853, %v2885
        %v2898 = vcombine.high %v2853, %v2885
        %v2899 = vcombine.low %v2860, %v2892
        %v2900 = vcombine.high %v2860, %v2892
        %2902 = vrot.lane.b32.xlu0 %v2894, 16
        %v2903 = vpop.permute.xlu0 %2902
        %2906 = vrot.lane.b32.xlu0 %v2895, 32
        %v2907 = vpop.permute.xlu0 %2906
        %2910 = vrot.lane.b32.xlu0 %v2896, 48
        %v2911 = vpop.permute.xlu0 %2910
        %2914 = vrot.lane.b32.xlu0 %v2897, 64
        %v2915 = vpop.permute.xlu0 %2914
        %2918 = vrot.lane.b32.xlu0 %v2898, 80
        %v2919 = vpop.permute.xlu0 %2918
        %2922 = vrot.lane.b32.xlu0 %v2899, 96
        %v2923 = vpop.permute.xlu0 %2922
        %2926 = vrot.lane.b32.xlu0 %v2900, 112
        %v2927 = vpop.permute.xlu0 %2926
        %v2929 = vsel %vm1372, %v2893, %v2903
        %vm2930 = vcmask 261120
        %v2931 = vsel %vm2930, %v2929, %v2907
        %vm2932 = vcmask 392192
        %v2933 = vsel %vm2932, %v2931, %v2911
        %vm2934 = vcmask 523264
        %v2935 = vsel %vm2934, %v2933, %v2915
        %vm2936 = vcmask 654336
        %v2937 = vsel %vm2936, %v2935, %v2919
        %vm2938 = vcmask 785408
        %v2939 = vsel %vm2938, %v2937, %v2923
        %vm2940 = vcmask 916480
        %v2941 = vsel %vm2940, %v2939, %v2927
        %v2942 = vld [vmem:[#allocation7] sm:$0xff]
        %v2943 = vld [vmem:[#allocation7 + $0x8] sm:$0xff]
        %v2944 = vld [vmem:[#allocation7 + $0x10] sm:$0xff]
        %v2945 = vld [vmem:[#allocation7 + $0x18] sm:$0xff]
        %v2946 = vld [vmem:[#allocation7 + $0x20] sm:$0xff]
        %v2947 = vld [vmem:[#allocation7 + $0x28] sm:$0xff]
        %v2948 = vld [vmem:[#allocation7 + $0x30] sm:$0xff]
        %v2949 = vld [vmem:[#allocation7 + $0x38] sm:$0xff]
        %v2950 = vld [vmem:[#allocation7 + $0x40] sm:$0xff]
        %v2951 = vld [vmem:[#allocation7 + $0x48] sm:$0xff]
        %v2952 = vld [vmem:[#allocation7 + $0x50] sm:$0xff]
        %v2953 = vld [vmem:[#allocation7 + $0x58] sm:$0xff]
        %v2954 = vld [vmem:[#allocation7 + $0x60] sm:$0xff]
        %v2955 = vld [vmem:[#allocation7 + $0x68] sm:$0xff]
        %v2956 = vld [vmem:[#allocation7 + $0x70] sm:$0xff]
        %v2957 = vld [vmem:[#allocation7 + $0x78] sm:$0xff]
        %v2958 = vld [vmem:[%s4] sm:$0x1]
        %v2960 = vlaneseq
        %v2961 = vshrl.u32 %v2960, 7
        %v2962 = vsub.s32 0, %v2961
        %v2963 = vrot.slane %v2958, %v2962
        %2965 = vmatprep.subr.mxu0 0.0
        %2966 = vmatpush1.msra.mxu0 %v2942
        %2967 = vmatprep.subr.mxu0 0.0
        %2968 = vmatpush1.msra.mxu0 %v2943
        %2969 = vmatprep.subr.mxu0 0.0
        %2970 = vmatpush1.msra.mxu0 %v2944
        %2971 = vmatprep.subr.mxu0 0.0
        %2972 = vmatpush1.msra.mxu0 %v2945
        %2973 = vmatprep.subr.mxu0 0.0
        %2974 = vmatpush1.msra.mxu0 %v2946
        %2975 = vmatprep.subr.mxu0 0.0
        %2976 = vmatpush1.msra.mxu0 %v2947
        %2977 = vmatprep.subr.mxu0 0.0
        %2978 = vmatpush1.msra.mxu0 %v2948
        %2979 = vmatprep.subr.mxu0 0.0
        %2980 = vmatpush1.msra.mxu0 %v2949
        %2981 = vmatprep.subr.mxu0 0.0
        %2982 = vmatpush1.msra.mxu0 %v2950
        %2983 = vmatprep.subr.mxu0 0.0
        %2984 = vmatpush1.msra.mxu0 %v2951
        %2985 = vmatprep.subr.mxu0 0.0
        %2986 = vmatpush1.msra.mxu0 %v2952
        %2987 = vmatprep.subr.mxu0 0.0
        %2988 = vmatpush1.msra.mxu0 %v2953
        %2989 = vmatprep.subr.mxu0 0.0
        %2990 = vmatpush1.msra.mxu0 %v2954
        %2991 = vmatprep.subr.mxu0 0.0
        %2992 = vmatpush1.msra.mxu0 %v2955
        %2993 = vmatprep.subr.mxu0 0.0
        %2994 = vmatpush1.msra.mxu0 %v2956
        %2995 = vmatprep.subr.mxu0 0.0
        %2996 = vmatpush1.msra.mxu0 %v2957
        %2997 = vmatprep.subr.mxu0 0.0
        %2998 = vmatpush1.msra.mxu0 0.0
        %2999 = vmatprep.subr.mxu0 0.0
        %3000 = vmatpush1.msra.mxu0 0.0
        %3001 = vmatprep.subr.mxu0 0.0
        %3002 = vmatpush1.msra.mxu0 0.0
        %3003 = vmatprep.subr.mxu0 0.0
        %3004 = vmatpush1.msra.mxu0 0.0
        %3005 = vmatprep.subr.mxu0 0.0
        %3006 = vmatpush1.msra.mxu0 0.0
        %3007 = vmatprep.subr.mxu0 0.0
        %3008 = vmatpush1.msra.mxu0 0.0
        %3009 = vmatprep.subr.mxu0 0.0
        %3010 = vmatpush1.msra.mxu0 0.0
        %3011 = vmatprep.subr.mxu0 0.0
        %3012 = vmatpush1.msra.mxu0 0.0
        %3013 = vmatprep.subr.mxu0 0.0
        %3014 = vmatpush1.msra.mxu0 0.0
        %3015 = vmatprep.subr.mxu0 0.0
        %3016 = vmatpush1.msra.mxu0 0.0
        %3017 = vmatprep.subr.mxu0 0.0
        %3018 = vmatpush1.msra.mxu0 0.0
        %3019 = vmatprep.subr.mxu0 0.0
        %3020 = vmatpush1.msra.mxu0 0.0
        %3021 = vmatprep.subr.mxu0 0.0
        %3022 = vmatpush1.msra.mxu0 0.0
        %3023 = vmatprep.subr.mxu0 0.0
        %3024 = vmatpush1.msra.mxu0 0.0
        %3025 = vmatprep.subr.mxu0 0.0
        %3026 = vmatpush1.msra.mxu0 0.0
        %3027 = vmatprep.subr.mxu0 0.0
        %3028 = vmatpush1.msra.mxu0 0.0
        %3029 = vmatprep.mubr.f32.mxu0 0.0
        %3030 = vmatmul.mubr.f32.gmra.mrb[0].mxu0 %v2941
        %v3031 = vpop.f32.mrb[0].mxu0
        %v3032 = vadd.f32 %v2963, %v3031
        %v3033 = vpop.f32.mrb[0].mxu0
        %3034 = vdwg.mxu0
        %3035 = vst [vmem:[%s282] sm:$0xff] %v3032
        %s3036 = sand.u32 %s155, 1
        %s3037 = scalar_lea.sflag [#allocation4], %s3036
        %s3038 = sand.u32 %s155, 1
        %s3039 = smul.addr %s3038, 8
        %s3040 = scalar_lea.vmem [#allocation8], %s3039
        // Predicated region
        $region53: #{tpu_custom_call.1} parent=39 // pred_check
          %p3041 = pneg %p165
        $region54: #{tpu_custom_call.1} parent=39 // pred_check_branch
          %3043 = sbr.rel (%p3041) target = $region56
        $region55: #{tpu_custom_call.1} parent=39 // pred_region
          %s3045 = ssub.s32 128, 128
          %3046 = vsyncadd %s3037, %s3045
          %s3047 = sadd.s32 %s28, %s27
          %s3048 = smul.addr %s3047, 128
          %s3049 = scalar_lea.hbm %s5, %s3048
          %s3051 = sshll.u32 %s3040, 4
          %s3052 = int_to_ptr.vmem [resolvable:$true] %s3051
          %3054 = dma.vmem_to_hbm [thread:$0]  %s3052, 128, %s3049, %s3037
        $region56: #{tpu_custom_call.1} parent=39 // pred_fallthru
          _
      $region40: #{tpu_custom_call.1} parent=5 // pred_fallthru
        _
      %p3055 = scmp.le.s32.totalorder 2, %s18
      // Predicated region
      $region57: #{tpu_custom_call.1} parent=5 // pred_check
        %p3056 = pneg %p3055
      $region58: #{tpu_custom_call.1} parent=5 // pred_check_branch
        %3058 = sbr.rel (%p3056) target = $region60
      $region59: #{tpu_custom_call.1} parent=5 // pred_region
        %s3059 = ssub.s32 %s18, 2
        // Predicated region
        $region61: #{tpu_custom_call.1} parent=59 // pred_check
          %p3060 = pneg %p171
        $region62: #{tpu_custom_call.1} parent=59 // pred_check_branch
          %3062 = sbr.rel (%p3060) target = $region64
        $region63: #{tpu_custom_call.1} parent=59 // pred_region
          %s3063 = sand.u32 %s156, 1
          %s3064 = scalar_lea.sflag [#allocation4], %s3063
          %s3065 = sand.u32 %s156, 1
          %s3066 = smul.addr %s3065, 8
          %s3067 = scalar_lea.vmem [#allocation8], %s3066
          %3068 = dma.done %s3064, 128
        $region64: #{tpu_custom_call.1} parent=59 // pred_fallthru
          _
      $region60: #{tpu_custom_call.1} parent=5 // pred_fallthru
        _
    $region6: #{tpu_custom_call.1} parent=1 // loop_footer
      %s22 = sadd.s32 1, %s18
    $region7: #{tpu_custom_call.1} parent=1 // loop_footer_branch
      %17 = sbr.rel target = $region3
    $region8: #{tpu_custom_call.1} parent=1 // loop_exit
      _
    %3069 = vsyncpa [#allocation3], 1
    %s3070 = scalar_lea.sflag [#allocation3], 1
    %3071 = vsyncpa %s3070, 1
    %3072 = vsyncpa [#allocation6], 1
    %3073 = vsyncpa [#allocation4], 1
    %s3074 = scalar_lea.sflag [#allocation4], 1
    %3075 = vsyncpa %s3074, 1

</llo_original>
